<compile_context>
chip_gen: v7x
topology: tpu7x:2x2x1
jax: 0.10.0
libtpu: 0.0.40
codegen_flags: <defaults>
</compile_context>

<pallas_src>
import functools
import math

import jax
import jax.numpy as jnp
from jax import lax
from jax.experimental import pallas as pl
from jax.experimental.pallas import tpu as pltpu


# ----------------------------------------------------------------------------------
# Interpolation matrix (PyTorch align_corners=False convention)
# ----------------------------------------------------------------------------------
def _interp_matrix(in_size: int, out_size: int) -> jnp.ndarray:
    """2-tap bilinear interpolation matrix, PyTorch align_corners=False convention."""
    scale = float(in_size) / float(out_size)
    dst = jnp.arange(out_size, dtype=jnp.float32)
    src = scale * (dst + 0.5) - 0.5
    src = jnp.maximum(src, 0.0)                       # PyTorch clamps negative src to 0
    x0 = jnp.floor(src).astype(jnp.int32)
    x1 = jnp.minimum(x0 + 1, in_size - 1)
    lam = src - x0.astype(jnp.float32)
    rows = jnp.arange(out_size)
    m = jnp.zeros((out_size, in_size), dtype=jnp.float32)
    m = m.at[rows, x0].add(1.0 - lam)
    m = m.at[rows, x1].add(lam)
    return m


# ----------------------------------------------------------------------------------
# Kernel
# ----------------------------------------------------------------------------------
def _resize_kernel(mh_ref, mwt_ref, x_ref, o_ref, *, tb, w_first):
    # mh_ref: (new_h, H)   mwt_ref: (W, new_w)
    # x_ref:  (tb, H, W)   o_ref:   (tb, new_h, new_w)
    mh = mh_ref[...]       # hoisted once per grid step
    mwt = mwt_ref[...]

    def body(i, carry):
        xi = x_ref[i]                                                   # (H, W)
        if w_first:
            # W is the short side: contract W first (smaller intermediate / fewer FLOPs).
            t = jnp.dot(xi, mwt, preferred_element_type=jnp.float32)    # (H, new_w)
            t = t.astype(mh.dtype)
            y = jnp.dot(mh, t, preferred_element_type=jnp.float32)      # (new_h, new_w)
        else:
            # H is the short side: contract H first.
            t = jnp.dot(mh, xi, preferred_element_type=jnp.float32)     # (new_h, W)
            t = t.astype(mwt.dtype)
            y = jnp.dot(t, mwt, preferred_element_type=jnp.float32)     # (new_h, new_w)
        o_ref[i] = y.astype(o_ref.dtype)    # per-image store bounds live ranges
        return carry

    lax.fori_loop(0, tb, body, None, unroll=True)


# ----------------------------------------------------------------------------------
# Generation-aware sizing
# ----------------------------------------------------------------------------------
def _tpu_params():
    """(vmem_capacity_bytes, num_tensorcores) with conservative fallbacks."""
    vmem_cap = 64 * 1024 * 1024          # conservative default (fits every generation)
    cores = 1
    try:
        info = pltpu.get_tpu_info()
        vmem_cap = int(getattr(info, "vmem_capacity_bytes", vmem_cap))
        # Heuristic: 64-MiB-per-core parts (v7x) have 2 TensorCores per chip.
        if vmem_cap <= 64 * 1024 * 1024:
            cores = 2
    except Exception:
        pass
    return vmem_cap, cores


def _choose_tb(b, h, w, new_h, new_w, vmem_cap, cores):
    """Images per grid step: big enough to amortize the ~0.35us/step overhead, small
    enough that double-buffered in+out blocks + matrices + intermediates fit VMEM."""
    per_img = 4 * (h * w + new_h * new_w)             # in + out bytes per image (1 buf)
    mat_bytes = 4 * (new_h * h + w * new_w)           # both interp matrices (1 buf)
    inter = 4 * min(h * new_w, new_h * w)             # per-image live intermediate
    headroom = 4 * 1024 * 1024 + inter                # compiler scratch + intermediate
    budget = min(int(0.70 * vmem_cap), vmem_cap - 2 * mat_bytes - headroom)
    cap = max(1, budget // (2 * per_img))             # 2x: double-buffered in+out
    cap = min(cap, 32, b)                             # bound per-step unroll

    fallback = 0
    for d in range(cap, 0, -1):                       # divisor of b => no padding
        if b % d != 0:
            continue
        if fallback == 0:
            fallback = d
        nt = b // d
        if cores == 1 or nt % cores == 0:             # even split across TensorCores
            return d
    return max(fallback, 1)


def _vmem_limit(tb, h, w, new_h, new_w, vmem_cap):
    per_img = 4 * (h * w + new_h * new_w)
    mat_bytes = 4 * (new_h * h + w * new_w)
    inter = 4 * min(h * new_w, new_h * w)
    need = 2 * tb * per_img + 2 * mat_bytes + inter + 6 * 1024 * 1024
    limit = min(need, vmem_cap - 2 * 1024 * 1024)
    return int(max(limit, 32 * 1024 * 1024))


# ----------------------------------------------------------------------------------
# Wrapper
# ----------------------------------------------------------------------------------
def short_side_scale_with_boxes(images, boxes, size, interpolation="bilinear",
                                backend="pytorch", use_bf16=False):
    assert interpolation == "bilinear" and backend == "pytorch"
    assert images.ndim == 4, "expected (C, T, H, W)"
    c, t, h, w = images.shape
    if w < h:
        new_h, new_w = int(math.floor(float(h) / w * size)), int(size)
    else:
        new_h, new_w = int(size), int(math.floor(float(w) / h * size))

    compute_dtype = jnp.bfloat16 if use_bf16 else jnp.float32
    m_h = _interp_matrix(h, new_h).astype(compute_dtype)       # (new_h, H)
    m_wt = _interp_matrix(w, new_w).T.astype(compute_dtype)    # (W, new_w)

    b = c * t
    x = images.reshape(b, h, w).astype(compute_dtype)

    vmem_cap, cores = _tpu_params()
    tb = _choose_tb(b, h, w, new_h, new_w, vmem_cap, cores)
    nt = b // tb
    w_first = w < h

    # Advisory cost estimate for the XLA scheduler.
    if w_first:
        flops_per_img = 2 * h * w * new_w + 2 * new_h * h * new_w
    else:
        flops_per_img = 2 * new_h * h * w + 2 * new_h * w * new_w
    itemsize = jnp.dtype(compute_dtype).itemsize
    cost = pl.CostEstimate(
        flops=b * flops_per_img,
        transcendentals=0,
        bytes_accessed=itemsize * b * h * w + 4 * b * new_h * new_w
        + itemsize * (new_h * h + w * new_w),
    )

    kernel = functools.partial(_resize_kernel, tb=tb, w_first=w_first)
    # NOTE: for production use, size >= 128 keeps the output last dim lane-dense;
    # tiny new_w (toy shapes) incurs masked stores but stays correct.
    resized = pl.pallas_call(
        kernel,
        out_shape=jax.ShapeDtypeStruct((b, new_h, new_w), jnp.float32),
        grid_spec=pltpu.PrefetchScalarGridSpec(
            num_scalar_prefetch=0,
            grid=(nt,),
            in_specs=[
                pl.BlockSpec((new_h, h), lambda i: (0, 0)),
                pl.BlockSpec((w, new_w), lambda i: (0, 0)),
                pl.BlockSpec((tb, h, w), lambda i: (i, 0, 0)),
            ],
            out_specs=pl.BlockSpec((tb, new_h, new_w), lambda i: (i, 0, 0)),
        ),
        compiler_params=pltpu.CompilerParams(
            dimension_semantics=("parallel",),
            vmem_limit_bytes=_vmem_limit(tb, h, w, new_h, new_w, vmem_cap),
        ),
        cost_estimate=cost,
    )(m_h, m_wt, x)
    resized = resized.reshape(c, t, new_h, new_w)

    # Box scaling is < one vreg of work: plain JAX multiply (no kernel launch).
    box_scale = jnp.float32(float(size) / float(min(h, w)))
    scaled_boxes = boxes.astype(jnp.float32) * box_scale

    return resized, scaled_boxes


class ShortSideScaleWithBoxes:
    """JAX/Pallas port of the PyTorch module."""

    def __init__(self, size, interpolation="bilinear", backend="pytorch",
                 use_bf16=False):
        self._size = size
        self._interpolation = interpolation
        self._backend = backend
        self._use_bf16 = use_bf16

    def __call__(self, images, boxes):
        return short_side_scale_with_boxes(
            images, boxes, self._size, self._interpolation, self._backend,
            use_bf16=self._use_bf16)


# ----------------------------------------------------------------------------------
# Pure-JAX reference + self test
# ----------------------------------------------------------------------------------
def _reference_resize(images, size):
    """Pure-JAX reference (same separable 2-tap formulation)."""
    c, t, h, w = images.shape
    if w < h:
        new_h, new_w = int(math.floor(float(h) / w * size)), int(size)
    else:
        new_h, new_w = int(size), int(math.floor(float(w) / h * size))
    m_h = _interp_matrix(h, new_h)
    m_wt = _interp_matrix(w, new_w).T
    x = images.reshape(c * t, h, w).astype(jnp.float32)
    y = jnp.einsum("oh,bhw,wn->bon", m_h, x, m_wt,
                   precision=jax.lax.Precision.HIGHEST)
    return y.reshape(c, t, new_h, new_w)


if __name__ == "__main__":
    key = jax.random.PRNGKey(0)
    k1, k2, k3 = jax.random.split(key, 3)

    # Case 1: H is the short side (h <= w branch).
    C, T, H, W = 3, 4, 16, 24
    SIZE = 8                              # -> new_h = 8, new_w = floor(24/16*8) = 12
    N_BOX = 6
    images = jax.random.uniform(k1, (C, T, H, W), dtype=jnp.float32) * 255.0
    boxes = jax.random.uniform(k2, (N_BOX, 4), dtype=jnp.float32) * float(W)

    mod = ShortSideScaleWithBoxes(SIZE, interpolation="bilinear", backend="pytorch")
    out_images, out_boxes = mod(images, boxes)
    jax.block_until_ready(out_images)
    jax.block_until_ready(out_boxes)

    assert out_images.shape == (C, T, SIZE, 12), out_images.shape
    assert out_boxes.shape == (N_BOX, 4), out_boxes.shape
    ref = _reference_resize(images, SIZE)
    assert jnp.allclose(out_images, ref, atol=1e-2, rtol=1e-4)
    assert jnp.allclose(out_boxes, boxes * (SIZE / min(H, W)), atol=1e-5)

    # Case 2: W is the short side (w < h branch).
    C2, T2, H2, W2, SIZE2 = 2, 3, 24, 16, 8   # -> new_h = 12, new_w = 8
    images2 = jax.random.uniform(k3, (C2, T2, H2, W2), dtype=jnp.float32) * 255.0
    out_images2, out_boxes2 = ShortSideScaleWithBoxes(SIZE2)(images2, boxes)
    jax.block_until_ready(out_images2)
    jax.block_until_ready(out_boxes2)
    assert out_images2.shape == (C2, T2, 12, SIZE2), out_images2.shape
    ref2 = _reference_resize(images2, SIZE2)
    assert jnp.allclose(out_images2, ref2, atol=1e-2, rtol=1e-4)

    print("KERNEL_OK")
</pallas_src>

<mosaic_0001>
module attributes {stable_mosaic.version = 11 : i64} {
  func.func @_resize_kernel(%arg0: i32, %arg1: memref<8x16xf32, #tpu.memory_space<vmem>>, %arg2: memref<24x12xf32, #tpu.memory_space<vmem>>, %arg3: memref<12x16x24xf32, #tpu.memory_space<vmem>>, %arg4: memref<12x8x12xf32, #tpu.memory_space<vmem>>) attributes {dimension_semantics = [#tpu.dimension_semantics<parallel>], iteration_bounds = array<i64: 1>, scalar_prefetch = 0 : i64, scratch_operands = 0 : i64, tpu.core_type = #tpu.core_type<tc>, window_params = [{pipeline_mode = #tpu.pipeline_mode<synchronous>, transform_indices = @transform_0, window_bounds = array<i64: 8, 16>}, {pipeline_mode = #tpu.pipeline_mode<synchronous>, transform_indices = @transform_1, window_bounds = array<i64: 24, 12>}, {transform_indices = @transform_2, window_bounds = array<i64: 12, 16, 24>}, {transform_indices = @transform_3, window_bounds = array<i64: 12, 8, 12>}]} {
    %c0 = arith.constant 0 : index
    %c0_0 = arith.constant 0 : index
    %0 = vector.load %arg1[%c0, %c0_0] : memref<8x16xf32, #tpu.memory_space<vmem>>, vector<8x16xf32>
    %c0_1 = arith.constant 0 : index
    %c0_2 = arith.constant 0 : index
    %1 = vector.load %arg2[%c0_1, %c0_2] : memref<24x12xf32, #tpu.memory_space<vmem>>, vector<24x12xf32>
    %c0_i32 = arith.constant 0 : i32
    %2 = arith.index_cast %c0_i32 : i32 to index
    %c0_3 = arith.constant 0 : index
    %c0_4 = arith.constant 0 : index
    %3 = vector.load %arg3[%2, %c0_3, %c0_4] : memref<12x16x24xf32, #tpu.memory_space<vmem>>, vector<1x16x24xf32>
    %4 = vector.shape_cast %3 : vector<1x16x24xf32> to vector<16x24xf32>
    %cst = arith.constant dense<0.000000e+00> : vector<8x24xf32>
    %5 = tpu.matmul %0, %4, %cst {dimension_numbers = #tpu.dot_dimension_numbers<[1], [0], [0], [1], [0, 0, 1, 1], [], []>} : vector<8x16xf32>, vector<16x24xf32>, vector<8x24xf32> -> vector<8x24xf32>
    %cst_5 = arith.constant dense<0.000000e+00> : vector<8x12xf32>
    %6 = tpu.matmul %5, %1, %cst_5 {dimension_numbers = #tpu.dot_dimension_numbers<[1], [0], [0], [1], [0, 0, 1, 1], [], []>} : vector<8x24xf32>, vector<24x12xf32>, vector<8x12xf32> -> vector<8x12xf32>
    %7 = arith.index_cast %c0_i32 : i32 to index
    %c0_6 = arith.constant 0 : index
    %c0_7 = arith.constant 0 : index
    %8 = vector.load %arg4[%7, %c0_6, %c0_7] : memref<12x8x12xf32, #tpu.memory_space<vmem>>, vector<1x8x12xf32>
    %9 = vector.shape_cast %8 : vector<1x8x12xf32> to vector<8x12xf32>
    %10 = vector.shape_cast %6 : vector<8x12xf32> to vector<1x8x12xf32>
    tpu.vector_store %arg4[%7, %c0_6, %c0_7], %10 {strides = array<i32>} : memref<12x8x12xf32, #tpu.memory_space<vmem>>, vector<1x8x12xf32>,
    %c1_i32 = arith.constant 1 : i32
    %11 = arith.index_cast %c1_i32 : i32 to index
    %c0_8 = arith.constant 0 : index
    %c0_9 = arith.constant 0 : index
    %12 = vector.load %arg3[%11, %c0_8, %c0_9] : memref<12x16x24xf32, #tpu.memory_space<vmem>>, vector<1x16x24xf32>
    %13 = vector.shape_cast %12 : vector<1x16x24xf32> to vector<16x24xf32>
    %cst_10 = arith.constant dense<0.000000e+00> : vector<8x24xf32>
    %14 = tpu.matmul %0, %13, %cst_10 {dimension_numbers = #tpu.dot_dimension_numbers<[1], [0], [0], [1], [0, 0, 1, 1], [], []>} : vector<8x16xf32>, vector<16x24xf32>, vector<8x24xf32> -> vector<8x24xf32>
    %cst_11 = arith.constant dense<0.000000e+00> : vector<8x12xf32>
    %15 = tpu.matmul %14, %1, %cst_11 {dimension_numbers = #tpu.dot_dimension_numbers<[1], [0], [0], [1], [0, 0, 1, 1], [], []>} : vector<8x24xf32>, vector<24x12xf32>, vector<8x12xf32> -> vector<8x12xf32>
    %16 = arith.index_cast %c1_i32 : i32 to index
    %c0_12 = arith.constant 0 : index
    %c0_13 = arith.constant 0 : index
    %17 = vector.load %arg4[%16, %c0_12, %c0_13] : memref<12x8x12xf32, #tpu.memory_space<vmem>>, vector<1x8x12xf32>
    %18 = vector.shape_cast %17 : vector<1x8x12xf32> to vector<8x12xf32>
    %19 = vector.shape_cast %15 : vector<8x12xf32> to vector<1x8x12xf32>
    tpu.vector_store %arg4[%16, %c0_12, %c0_13], %19 {strides = array<i32>} : memref<12x8x12xf32, #tpu.memory_space<vmem>>, vector<1x8x12xf32>,
    %c2_i32 = arith.constant 2 : i32
    %20 = arith.index_cast %c2_i32 : i32 to index
    %c0_14 = arith.constant 0 : index
    %c0_15 = arith.constant 0 : index
    %21 = vector.load %arg3[%20, %c0_14, %c0_15] : memref<12x16x24xf32, #tpu.memory_space<vmem>>, vector<1x16x24xf32>
    %22 = vector.shape_cast %21 : vector<1x16x24xf32> to vector<16x24xf32>
    %cst_16 = arith.constant dense<0.000000e+00> : vector<8x24xf32>
    %23 = tpu.matmul %0, %22, %cst_16 {dimension_numbers = #tpu.dot_dimension_numbers<[1], [0], [0], [1], [0, 0, 1, 1], [], []>} : vector<8x16xf32>, vector<16x24xf32>, vector<8x24xf32> -> vector<8x24xf32>
    %cst_17 = arith.constant dense<0.000000e+00> : vector<8x12xf32>
    %24 = tpu.matmul %23, %1, %cst_17 {dimension_numbers = #tpu.dot_dimension_numbers<[1], [0], [0], [1], [0, 0, 1, 1], [], []>} : vector<8x24xf32>, vector<24x12xf32>, vector<8x12xf32> -> vector<8x12xf32>
    %25 = arith.index_cast %c2_i32 : i32 to index
    %c0_18 = arith.constant 0 : index
    %c0_19 = arith.constant 0 : index
    %26 = vector.load %arg4[%25, %c0_18, %c0_19] : memref<12x8x12xf32, #tpu.memory_space<vmem>>, vector<1x8x12xf32>
    %27 = vector.shape_cast %26 : vector<1x8x12xf32> to vector<8x12xf32>
    %28 = vector.shape_cast %24 : vector<8x12xf32> to vector<1x8x12xf32>
    tpu.vector_store %arg4[%25, %c0_18, %c0_19], %28 {strides = array<i32>} : memref<12x8x12xf32, #tpu.memory_space<vmem>>, vector<1x8x12xf32>,
    %c3_i32 = arith.constant 3 : i32
    %29 = arith.index_cast %c3_i32 : i32 to index
    %c0_20 = arith.constant 0 : index
    %c0_21 = arith.constant 0 : index
    %30 = vector.load %arg3[%29, %c0_20, %c0_21] : memref<12x16x24xf32, #tpu.memory_space<vmem>>, vector<1x16x24xf32>
    %31 = vector.shape_cast %30 : vector<1x16x24xf32> to vector<16x24xf32>
    %cst_22 = arith.constant dense<0.000000e+00> : vector<8x24xf32>
    %32 = tpu.matmul %0, %31, %cst_22 {dimension_numbers = #tpu.dot_dimension_numbers<[1], [0], [0], [1], [0, 0, 1, 1], [], []>} : vector<8x16xf32>, vector<16x24xf32>, vector<8x24xf32> -> vector<8x24xf32>
    %cst_23 = arith.constant dense<0.000000e+00> : vector<8x12xf32>
    %33 = tpu.matmul %32, %1, %cst_23 {dimension_numbers = #tpu.dot_dimension_numbers<[1], [0], [0], [1], [0, 0, 1, 1], [], []>} : vector<8x24xf32>, vector<24x12xf32>, vector<8x12xf32> -> vector<8x12xf32>
    %34 = arith.index_cast %c3_i32 : i32 to index
    %c0_24 = arith.constant 0 : index
    %c0_25 = arith.constant 0 : index
    %35 = vector.load %arg4[%34, %c0_24, %c0_25] : memref<12x8x12xf32, #tpu.memory_space<vmem>>, vector<1x8x12xf32>
    %36 = vector.shape_cast %35 : vector<1x8x12xf32> to vector<8x12xf32>
    %37 = vector.shape_cast %33 : vector<8x12xf32> to vector<1x8x12xf32>
    tpu.vector_store %arg4[%34, %c0_24, %c0_25], %37 {strides = array<i32>} : memref<12x8x12xf32, #tpu.memory_space<vmem>>, vector<1x8x12xf32>,
    %c4_i32 = arith.constant 4 : i32
    %38 = arith.index_cast %c4_i32 : i32 to index
    %c0_26 = arith.constant 0 : index
    %c0_27 = arith.constant 0 : index
    %39 = vector.load %arg3[%38, %c0_26, %c0_27] : memref<12x16x24xf32, #tpu.memory_space<vmem>>, vector<1x16x24xf32>
    %40 = vector.shape_cast %39 : vector<1x16x24xf32> to vector<16x24xf32>
    %cst_28 = arith.constant dense<0.000000e+00> : vector<8x24xf32>
    %41 = tpu.matmul %0, %40, %cst_28 {dimension_numbers = #tpu.dot_dimension_numbers<[1], [0], [0], [1], [0, 0, 1, 1], [], []>} : vector<8x16xf32>, vector<16x24xf32>, vector<8x24xf32> -> vector<8x24xf32>
    %cst_29 = arith.constant dense<0.000000e+00> : vector<8x12xf32>
    %42 = tpu.matmul %41, %1, %cst_29 {dimension_numbers = #tpu.dot_dimension_numbers<[1], [0], [0], [1], [0, 0, 1, 1], [], []>} : vector<8x24xf32>, vector<24x12xf32>, vector<8x12xf32> -> vector<8x12xf32>
    %43 = arith.index_cast %c4_i32 : i32 to index
    %c0_30 = arith.constant 0 : index
    %c0_31 = arith.constant 0 : index
    %44 = vector.load %arg4[%43, %c0_30, %c0_31] : memref<12x8x12xf32, #tpu.memory_space<vmem>>, vector<1x8x12xf32>
    %45 = vector.shape_cast %44 : vector<1x8x12xf32> to vector<8x12xf32>
    %46 = vector.shape_cast %42 : vector<8x12xf32> to vector<1x8x12xf32>
    tpu.vector_store %arg4[%43, %c0_30, %c0_31], %46 {strides = array<i32>} : memref<12x8x12xf32, #tpu.memory_space<vmem>>, vector<1x8x12xf32>,
    %c5_i32 = arith.constant 5 : i32
    %47 = arith.index_cast %c5_i32 : i32 to index
    %c0_32 = arith.constant 0 : index
    %c0_33 = arith.constant 0 : index
    %48 = vector.load %arg3[%47, %c0_32, %c0_33] : memref<12x16x24xf32, #tpu.memory_space<vmem>>, vector<1x16x24xf32>
    %49 = vector.shape_cast %48 : vector<1x16x24xf32> to vector<16x24xf32>
    %cst_34 = arith.constant dense<0.000000e+00> : vector<8x24xf32>
    %50 = tpu.matmul %0, %49, %cst_34 {dimension_numbers = #tpu.dot_dimension_numbers<[1], [0], [0], [1], [0, 0, 1, 1], [], []>} : vector<8x16xf32>, vector<16x24xf32>, vector<8x24xf32> -> vector<8x24xf32>
    %cst_35 = arith.constant dense<0.000000e+00> : vector<8x12xf32>
    %51 = tpu.matmul %50, %1, %cst_35 {dimension_numbers = #tpu.dot_dimension_numbers<[1], [0], [0], [1], [0, 0, 1, 1], [], []>} : vector<8x24xf32>, vector<24x12xf32>, vector<8x12xf32> -> vector<8x12xf32>
    %52 = arith.index_cast %c5_i32 : i32 to index
    %c0_36 = arith.constant 0 : index
    %c0_37 = arith.constant 0 : index
    %53 = vector.load %arg4[%52, %c0_36, %c0_37] : memref<12x8x12xf32, #tpu.memory_space<vmem>>, vector<1x8x12xf32>
    %54 = vector.shape_cast %53 : vector<1x8x12xf32> to vector<8x12xf32>
    %55 = vector.shape_cast %51 : vector<8x12xf32> to vector<1x8x12xf32>
    tpu.vector_store %arg4[%52, %c0_36, %c0_37], %55 {strides = array<i32>} : memref<12x8x12xf32, #tpu.memory_space<vmem>>, vector<1x8x12xf32>,
    %c6_i32 = arith.constant 6 : i32
    %56 = arith.index_cast %c6_i32 : i32 to index
    %c0_38 = arith.constant 0 : index
    %c0_39 = arith.constant 0 : index
    %57 = vector.load %arg3[%56, %c0_38, %c0_39] : memref<12x16x24xf32, #tpu.memory_space<vmem>>, vector<1x16x24xf32>
    %58 = vector.shape_cast %57 : vector<1x16x24xf32> to vector<16x24xf32>
    %cst_40 = arith.constant dense<0.000000e+00> : vector<8x24xf32>
    %59 = tpu.matmul %0, %58, %cst_40 {dimension_numbers = #tpu.dot_dimension_numbers<[1], [0], [0], [1], [0, 0, 1, 1], [], []>} : vector<8x16xf32>, vector<16x24xf32>, vector<8x24xf32> -> vector<8x24xf32>
    %cst_41 = arith.constant dense<0.000000e+00> : vector<8x12xf32>
    %60 = tpu.matmul %59, %1, %cst_41 {dimension_numbers = #tpu.dot_dimension_numbers<[1], [0], [0], [1], [0, 0, 1, 1], [], []>} : vector<8x24xf32>, vector<24x12xf32>, vector<8x12xf32> -> vector<8x12xf32>
    %61 = arith.index_cast %c6_i32 : i32 to index
    %c0_42 = arith.constant 0 : index
    %c0_43 = arith.constant 0 : index
    %62 = vector.load %arg4[%61, %c0_42, %c0_43] : memref<12x8x12xf32, #tpu.memory_space<vmem>>, vector<1x8x12xf32>
    %63 = vector.shape_cast %62 : vector<1x8x12xf32> to vector<8x12xf32>
    %64 = vector.shape_cast %60 : vector<8x12xf32> to vector<1x8x12xf32>
    tpu.vector_store %arg4[%61, %c0_42, %c0_43], %64 {strides = array<i32>} : memref<12x8x12xf32, #tpu.memory_space<vmem>>, vector<1x8x12xf32>,
    %c7_i32 = arith.constant 7 : i32
    %65 = arith.index_cast %c7_i32 : i32 to index
    %c0_44 = arith.constant 0 : index
    %c0_45 = arith.constant 0 : index
    %66 = vector.load %arg3[%65, %c0_44, %c0_45] : memref<12x16x24xf32, #tpu.memory_space<vmem>>, vector<1x16x24xf32>
    %67 = vector.shape_cast %66 : vector<1x16x24xf32> to vector<16x24xf32>
    %cst_46 = arith.constant dense<0.000000e+00> : vector<8x24xf32>
    %68 = tpu.matmul %0, %67, %cst_46 {dimension_numbers = #tpu.dot_dimension_numbers<[1], [0], [0], [1], [0, 0, 1, 1], [], []>} : vector<8x16xf32>, vector<16x24xf32>, vector<8x24xf32> -> vector<8x24xf32>
    %cst_47 = arith.constant dense<0.000000e+00> : vector<8x12xf32>
    %69 = tpu.matmul %68, %1, %cst_47 {dimension_numbers = #tpu.dot_dimension_numbers<[1], [0], [0], [1], [0, 0, 1, 1], [], []>} : vector<8x24xf32>, vector<24x12xf32>, vector<8x12xf32> -> vector<8x12xf32>
    %70 = arith.index_cast %c7_i32 : i32 to index
    %c0_48 = arith.constant 0 : index
    %c0_49 = arith.constant 0 : index
    %71 = vector.load %arg4[%70, %c0_48, %c0_49] : memref<12x8x12xf32, #tpu.memory_space<vmem>>, vector<1x8x12xf32>
    %72 = vector.shape_cast %71 : vector<1x8x12xf32> to vector<8x12xf32>
    %73 = vector.shape_cast %69 : vector<8x12xf32> to vector<1x8x12xf32>
    tpu.vector_store %arg4[%70, %c0_48, %c0_49], %73 {strides = array<i32>} : memref<12x8x12xf32, #tpu.memory_space<vmem>>, vector<1x8x12xf32>,
    %c8_i32 = arith.constant 8 : i32
    %74 = arith.index_cast %c8_i32 : i32 to index
    %c0_50 = arith.constant 0 : index
    %c0_51 = arith.constant 0 : index
    %75 = vector.load %arg3[%74, %c0_50, %c0_51] : memref<12x16x24xf32, #tpu.memory_space<vmem>>, vector<1x16x24xf32>
    %76 = vector.shape_cast %75 : vector<1x16x24xf32> to vector<16x24xf32>
    %cst_52 = arith.constant dense<0.000000e+00> : vector<8x24xf32>
    %77 = tpu.matmul %0, %76, %cst_52 {dimension_numbers = #tpu.dot_dimension_numbers<[1], [0], [0], [1], [0, 0, 1, 1], [], []>} : vector<8x16xf32>, vector<16x24xf32>, vector<8x24xf32> -> vector<8x24xf32>
    %cst_53 = arith.constant dense<0.000000e+00> : vector<8x12xf32>
    %78 = tpu.matmul %77, %1, %cst_53 {dimension_numbers = #tpu.dot_dimension_numbers<[1], [0], [0], [1], [0, 0, 1, 1], [], []>} : vector<8x24xf32>, vector<24x12xf32>, vector<8x12xf32> -> vector<8x12xf32>
    %79 = arith.index_cast %c8_i32 : i32 to index
    %c0_54 = arith.constant 0 : index
    %c0_55 = arith.constant 0 : index
    %80 = vector.load %arg4[%79, %c0_54, %c0_55] : memref<12x8x12xf32, #tpu.memory_space<vmem>>, vector<1x8x12xf32>
    %81 = vector.shape_cast %80 : vector<1x8x12xf32> to vector<8x12xf32>
    %82 = vector.shape_cast %78 : vector<8x12xf32> to vector<1x8x12xf32>
    tpu.vector_store %arg4[%79, %c0_54, %c0_55], %82 {strides = array<i32>} : memref<12x8x12xf32, #tpu.memory_space<vmem>>, vector<1x8x12xf32>,
    %c9_i32 = arith.constant 9 : i32
    %83 = arith.index_cast %c9_i32 : i32 to index
    %c0_56 = arith.constant 0 : index
    %c0_57 = arith.constant 0 : index
    %84 = vector.load %arg3[%83, %c0_56, %c0_57] : memref<12x16x24xf32, #tpu.memory_space<vmem>>, vector<1x16x24xf32>
    %85 = vector.shape_cast %84 : vector<1x16x24xf32> to vector<16x24xf32>
    %cst_58 = arith.constant dense<0.000000e+00> : vector<8x24xf32>
    %86 = tpu.matmul %0, %85, %cst_58 {dimension_numbers = #tpu.dot_dimension_numbers<[1], [0], [0], [1], [0, 0, 1, 1], [], []>} : vector<8x16xf32>, vector<16x24xf32>, vector<8x24xf32> -> vector<8x24xf32>
    %cst_59 = arith.constant dense<0.000000e+00> : vector<8x12xf32>
    %87 = tpu.matmul %86, %1, %cst_59 {dimension_numbers = #tpu.dot_dimension_numbers<[1], [0], [0], [1], [0, 0, 1, 1], [], []>} : vector<8x24xf32>, vector<24x12xf32>, vector<8x12xf32> -> vector<8x12xf32>
    %88 = arith.index_cast %c9_i32 : i32 to index
    %c0_60 = arith.constant 0 : index
    %c0_61 = arith.constant 0 : index
    %89 = vector.load %arg4[%88, %c0_60, %c0_61] : memref<12x8x12xf32, #tpu.memory_space<vmem>>, vector<1x8x12xf32>
    %90 = vector.shape_cast %89 : vector<1x8x12xf32> to vector<8x12xf32>
    %91 = vector.shape_cast %87 : vector<8x12xf32> to vector<1x8x12xf32>
    tpu.vector_store %arg4[%88, %c0_60, %c0_61], %91 {strides = array<i32>} : memref<12x8x12xf32, #tpu.memory_space<vmem>>, vector<1x8x12xf32>,
    %c10_i32 = arith.constant 10 : i32
    %92 = arith.index_cast %c10_i32 : i32 to index
    %c0_62 = arith.constant 0 : index
    %c0_63 = arith.constant 0 : index
    %93 = vector.load %arg3[%92, %c0_62, %c0_63] : memref<12x16x24xf32, #tpu.memory_space<vmem>>, vector<1x16x24xf32>
    %94 = vector.shape_cast %93 : vector<1x16x24xf32> to vector<16x24xf32>
    %cst_64 = arith.constant dense<0.000000e+00> : vector<8x24xf32>
    %95 = tpu.matmul %0, %94, %cst_64 {dimension_numbers = #tpu.dot_dimension_numbers<[1], [0], [0], [1], [0, 0, 1, 1], [], []>} : vector<8x16xf32>, vector<16x24xf32>, vector<8x24xf32> -> vector<8x24xf32>
    %cst_65 = arith.constant dense<0.000000e+00> : vector<8x12xf32>
    %96 = tpu.matmul %95, %1, %cst_65 {dimension_numbers = #tpu.dot_dimension_numbers<[1], [0], [0], [1], [0, 0, 1, 1], [], []>} : vector<8x24xf32>, vector<24x12xf32>, vector<8x12xf32> -> vector<8x12xf32>
    %97 = arith.index_cast %c10_i32 : i32 to index
    %c0_66 = arith.constant 0 : index
    %c0_67 = arith.constant 0 : index
    %98 = vector.load %arg4[%97, %c0_66, %c0_67] : memref<12x8x12xf32, #tpu.memory_space<vmem>>, vector<1x8x12xf32>
    %99 = vector.shape_cast %98 : vector<1x8x12xf32> to vector<8x12xf32>
    %100 = vector.shape_cast %96 : vector<8x12xf32> to vector<1x8x12xf32>
    tpu.vector_store %arg4[%97, %c0_66, %c0_67], %100 {strides = array<i32>} : memref<12x8x12xf32, #tpu.memory_space<vmem>>, vector<1x8x12xf32>,
    %c11_i32 = arith.constant 11 : i32
    %101 = arith.index_cast %c11_i32 : i32 to index
    %c0_68 = arith.constant 0 : index
    %c0_69 = arith.constant 0 : index
    %102 = vector.load %arg3[%101, %c0_68, %c0_69] : memref<12x16x24xf32, #tpu.memory_space<vmem>>, vector<1x16x24xf32>
    %103 = vector.shape_cast %102 : vector<1x16x24xf32> to vector<16x24xf32>
    %cst_70 = arith.constant dense<0.000000e+00> : vector<8x24xf32>
    %104 = tpu.matmul %0, %103, %cst_70 {dimension_numbers = #tpu.dot_dimension_numbers<[1], [0], [0], [1], [0, 0, 1, 1], [], []>} : vector<8x16xf32>, vector<16x24xf32>, vector<8x24xf32> -> vector<8x24xf32>
    %cst_71 = arith.constant dense<0.000000e+00> : vector<8x12xf32>
    %105 = tpu.matmul %104, %1, %cst_71 {dimension_numbers = #tpu.dot_dimension_numbers<[1], [0], [0], [1], [0, 0, 1, 1], [], []>} : vector<8x24xf32>, vector<24x12xf32>, vector<8x12xf32> -> vector<8x12xf32>
    %106 = arith.index_cast %c11_i32 : i32 to index
    %c0_72 = arith.constant 0 : index
    %c0_73 = arith.constant 0 : index
    %107 = vector.load %arg4[%106, %c0_72, %c0_73] : memref<12x8x12xf32, #tpu.memory_space<vmem>>, vector<1x8x12xf32>
    %108 = vector.shape_cast %107 : vector<1x8x12xf32> to vector<8x12xf32>
    %109 = vector.shape_cast %105 : vector<8x12xf32> to vector<1x8x12xf32>
    tpu.vector_store %arg4[%106, %c0_72, %c0_73], %109 {strides = array<i32>} : memref<12x8x12xf32, #tpu.memory_space<vmem>>, vector<1x8x12xf32>,
    %c12_i32 = arith.constant 12 : i32
    return
  }
  func.func @transform_0(%arg0: i32) -> (i32, i32) {
    %c0_i32 = arith.constant 0 : i32
    %c0_i32_0 = arith.constant 0 : i32
    %c0_i32_1 = arith.constant 0 : i32
    return %c0_i32, %c0_i32_0 : i32, i32
  }
  func.func @transform_1(%arg0: i32) -> (i32, i32) {
    %c0_i32 = arith.constant 0 : i32
    %c0_i32_0 = arith.constant 0 : i32
    %c0_i32_1 = arith.constant 0 : i32
    return %c0_i32, %c0_i32_0 : i32, i32
  }
  func.func @transform_2(%arg0: i32) -> (i32, i32, i32) {
    %c0_i32 = arith.constant 0 : i32
    %c0_i32_0 = arith.constant 0 : i32
    %c0_i32_1 = arith.constant 0 : i32
    return %arg0, %c0_i32, %c0_i32_0 : i32, i32, i32
  }
  func.func @transform_3(%arg0: i32) -> (i32, i32, i32) {
    %c0_i32 = arith.constant 0 : i32
    %c0_i32_0 = arith.constant 0 : i32
    %c0_i32_1 = arith.constant 0 : i32
    return %arg0, %c0_i32, %c0_i32_0 : i32, i32, i32
  }
}

</mosaic_0001>

<llo_original>
// kernel: tpu_custom_call.1
$region0: #{tpu_custom_call.1}
  #allocation0 [shape = 'u32[]', space=smem, size = 0x4, offset = 0x4, fixed_abs, tag = 'smem constant byte address 0x4 - core index']
  #allocation1 [shape = 'u32[144,128]{1,0:T(1,128)}', space=vmem, size = 0x12000, scoped, tag = 'internal scratch']
  %s0 = inlined_call_operand.vmem [shape: f32[8,16], index: 0, kind: input, shape index: {}]
  %s1 = inlined_call_operand.vmem [shape: f32[24,12], index: 1, kind: input, shape index: {}]
  %s2 = inlined_call_operand.hbm [shape: f32[12,16,24], index: 2, kind: input, shape index: {}]
  %s3 = inlined_call_operand.hbm [shape: f32[12,8,12], index: 3, kind: output, shape index: {}]
  %s4 = sld [smem:[#allocation0]]
  $region26: #{tpu_custom_call.1} parent=0
    _
  %s6 = ssub.s32 1, %s4
  %s7 = scalar_select 0, %s6, %s4
  $region1: #{tpu_custom_call.1} parent=0
    #allocation2 [shape = 'u8[98304]{0}', space=vmem, size = 0x18000, scoped, tag = 'input window, operand 2, single buffered']
    #allocation3 [shape = 's32[1]{0}', space=sflag, size = 0x4, scoped, tag = 'scoped memory for tpu_custom_call.1']
    #allocation4 [shape = 's32[1]{0}', space=sflag, size = 0x4, scoped, tag = 'scoped memory for tpu_custom_call.1']
    #allocation5 [shape = 'u8[49152]{0}', space=vmem, size = 0xc000, scoped, tag = 'output window, operand 0, single buffered']
    %8 = vsyncpa [#allocation3], 0
    %9 = vsyncpa [#allocation4], 0
    // Predicated region
    $region2: #{tpu_custom_call.1} parent=1 // pred_check
      _
    $region3: #{tpu_custom_call.1} parent=1 // pred_check_branch
      %11 = sbr.rel (0) target = $region5
    $region4: #{tpu_custom_call.1} parent=1 // pred_region
      _
    $region5: #{tpu_custom_call.1} parent=1 // pred_fallthru
      _
    // Predicated region
    $region6: #{tpu_custom_call.1} parent=1 // pred_check
      _
    $region7: #{tpu_custom_call.1} parent=1 // pred_check_branch
      %13 = sbr.rel (0) target = $region9
    $region8: #{tpu_custom_call.1} parent=1 // pred_region
      _
    $region9: #{tpu_custom_call.1} parent=1 // pred_fallthru
      _
    // Predicated region
    $region10: #{tpu_custom_call.1} parent=1 // pred_check
      _
    $region11: #{tpu_custom_call.1} parent=1 // pred_check_branch
      %15 = sbr.rel (0) target = $region13
    $region12: #{tpu_custom_call.1} parent=1 // pred_region
      %s17 = ssub.s32 3072, 3072
      %18 = vsyncadd [#allocation3], %s17
      %s19 = sshll.u32 [#allocation2], 4
      %s20 = int_to_ptr.vmem [resolvable:$true] %s19
      %25 = dma.hbm_to_vmem [thread:$0]  %s2, 3072, %s20, [#allocation3], 128, 128, 8
    $region13: #{tpu_custom_call.1} parent=1 // pred_fallthru
      _
    // Predicated region
    $region14: #{tpu_custom_call.1} parent=1 // pred_check
      _
    $region15: #{tpu_custom_call.1} parent=1 // pred_check_branch
      %27 = sbr.rel (0) target = $region17
    $region16: #{tpu_custom_call.1} parent=1 // pred_region
      %28 = dma.done [#allocation3], 3072
    $region17: #{tpu_custom_call.1} parent=1 // pred_fallthru
      _
    %v29 = vld [vmem:[%s0] sm:$0xff]
    %v30 = vld [vmem:[%s1] sm:$0xff]
    %v31 = vld [vmem:[%s1 + $0x8] sm:$0xff]
    %v32 = vld [vmem:[%s1 + $0x10] sm:$0xff]
    %v33 = vld [vmem:[#allocation2] sm:$0xff]
    %v34 = vld [vmem:[#allocation2 + $0x8] sm:$0xff]
    %vm35 = vcmask 130048
    %v37 = vsel %vm35, %v29, 0
    %39 = vmatprep.subr.mxu0 0.0
    %40 = vmatpush1.msra.mxu0 %v33
    %41 = vmatprep.subr.mxu0 0.0
    %42 = vmatpush1.msra.mxu0 %v34
    %43 = vmatprep.subr.mxu0 0.0
    %44 = vmatpush1.msra.mxu0 0.0
    %45 = vmatprep.subr.mxu0 0.0
    %46 = vmatpush1.msra.mxu0 0.0
    %47 = vmatprep.subr.mxu0 0.0
    %48 = vmatpush1.msra.mxu0 0.0
    %49 = vmatprep.subr.mxu0 0.0
    %50 = vmatpush1.msra.mxu0 0.0
    %51 = vmatprep.subr.mxu0 0.0
    %52 = vmatpush1.msra.mxu0 0.0
    %53 = vmatprep.subr.mxu0 0.0
    %54 = vmatpush1.msra.mxu0 0.0
    %55 = vmatprep.subr.mxu0 0.0
    %56 = vmatpush1.msra.mxu0 0.0
    %57 = vmatprep.subr.mxu0 0.0
    %58 = vmatpush1.msra.mxu0 0.0
    %59 = vmatprep.subr.mxu0 0.0
    %60 = vmatpush1.msra.mxu0 0.0
    %61 = vmatprep.subr.mxu0 0.0
    %62 = vmatpush1.msra.mxu0 0.0
    %63 = vmatprep.subr.mxu0 0.0
    %64 = vmatpush1.msra.mxu0 0.0
    %65 = vmatprep.subr.mxu0 0.0
    %66 = vmatpush1.msra.mxu0 0.0
    %67 = vmatprep.subr.mxu0 0.0
    %68 = vmatpush1.msra.mxu0 0.0
    %69 = vmatprep.subr.mxu0 0.0
    %70 = vmatpush1.msra.mxu0 0.0
    %71 = vmatprep.subr.mxu0 0.0
    %72 = vmatpush1.msra.mxu0 0.0
    %73 = vmatprep.subr.mxu0 0.0
    %74 = vmatpush1.msra.mxu0 0.0
    %75 = vmatprep.subr.mxu0 0.0
    %76 = vmatpush1.msra.mxu0 0.0
    %77 = vmatprep.subr.mxu0 0.0
    %78 = vmatpush1.msra.mxu0 0.0
    %79 = vmatprep.subr.mxu0 0.0
    %80 = vmatpush1.msra.mxu0 0.0
    %81 = vmatprep.subr.mxu0 0.0
    %82 = vmatpush1.msra.mxu0 0.0
    %83 = vmatprep.subr.mxu0 0.0
    %84 = vmatpush1.msra.mxu0 0.0
    %85 = vmatprep.subr.mxu0 0.0
    %86 = vmatpush1.msra.mxu0 0.0
    %87 = vmatprep.subr.mxu0 0.0
    %88 = vmatpush1.msra.mxu0 0.0
    %89 = vmatprep.subr.mxu0 0.0
    %90 = vmatpush1.msra.mxu0 0.0
    %91 = vmatprep.subr.mxu0 0.0
    %92 = vmatpush1.msra.mxu0 0.0
    %93 = vmatprep.subr.mxu0 0.0
    %94 = vmatpush1.msra.mxu0 0.0
    %95 = vmatprep.subr.mxu0 0.0
    %96 = vmatpush1.msra.mxu0 0.0
    %97 = vmatprep.subr.mxu0 0.0
    %98 = vmatpush1.msra.mxu0 0.0
    %99 = vmatprep.subr.mxu0 0.0
    %100 = vmatpush1.msra.mxu0 0.0
    %101 = vmatprep.subr.mxu0 0.0
    %102 = vmatpush1.msra.mxu0 0.0
    %103 = vmatprep.mubr.f32.mxu0 0.0
    %104 = vmatmul.mubr.f32.gmra.mrb[0].mxu0 %v37
    %v105 = vpop.f32.mrb[0].mxu0
    %v106 = vadd.f32 0.0, %v105
    %v107 = vpop.f32.mrb[0].mxu0
    %108 = vdwg.mxu0
    %vm109 = vcmask 195584
    %v111 = vsel %vm109, %v106, 0
    %113 = vmatprep.subr.mxu0 0.0
    %114 = vmatpush1.msra.mxu0 %v30
    %115 = vmatprep.subr.mxu0 0.0
    %116 = vmatpush1.msra.mxu0 %v31
    %117 = vmatprep.subr.mxu0 0.0
    %118 = vmatpush1.msra.mxu0 %v32
    %119 = vmatprep.subr.mxu0 0.0
    %120 = vmatpush1.msra.mxu0 0.0
    %121 = vmatprep.subr.mxu0 0.0
    %122 = vmatpush1.msra.mxu0 0.0
    %123 = vmatprep.subr.mxu0 0.0
    %124 = vmatpush1.msra.mxu0 0.0
    %125 = vmatprep.subr.mxu0 0.0
    %126 = vmatpush1.msra.mxu0 0.0
    %127 = vmatprep.subr.mxu0 0.0
    %128 = vmatpush1.msra.mxu0 0.0
    %129 = vmatprep.subr.mxu0 0.0
    %130 = vmatpush1.msra.mxu0 0.0
    %131 = vmatprep.subr.mxu0 0.0
    %132 = vmatpush1.msra.mxu0 0.0
    %133 = vmatprep.subr.mxu0 0.0
    %134 = vmatpush1.msra.mxu0 0.0
    %135 = vmatprep.subr.mxu0 0.0
    %136 = vmatpush1.msra.mxu0 0.0
    %137 = vmatprep.subr.mxu0 0.0
    %138 = vmatpush1.msra.mxu0 0.0
    %139 = vmatprep.subr.mxu0 0.0
    %140 = vmatpush1.msra.mxu0 0.0
    %141 = vmatprep.subr.mxu0 0.0
    %142 = vmatpush1.msra.mxu0 0.0
    %143 = vmatprep.subr.mxu0 0.0
    %144 = vmatpush1.msra.mxu0 0.0
    %145 = vmatprep.subr.mxu0 0.0
    %146 = vmatpush1.msra.mxu0 0.0
    %147 = vmatprep.subr.mxu0 0.0
    %148 = vmatpush1.msra.mxu0 0.0
    %149 = vmatprep.subr.mxu0 0.0
    %150 = vmatpush1.msra.mxu0 0.0
    %151 = vmatprep.subr.mxu0 0.0
    %152 = vmatpush1.msra.mxu0 0.0
    %153 = vmatprep.subr.mxu0 0.0
    %154 = vmatpush1.msra.mxu0 0.0
    %155 = vmatprep.subr.mxu0 0.0
    %156 = vmatpush1.msra.mxu0 0.0
    %157 = vmatprep.subr.mxu0 0.0
    %158 = vmatpush1.msra.mxu0 0.0
    %159 = vmatprep.subr.mxu0 0.0
    %160 = vmatpush1.msra.mxu0 0.0
    %161 = vmatprep.subr.mxu0 0.0
    %162 = vmatpush1.msra.mxu0 0.0
    %163 = vmatprep.subr.mxu0 0.0
    %164 = vmatpush1.msra.mxu0 0.0
    %165 = vmatprep.subr.mxu0 0.0
    %166 = vmatpush1.msra.mxu0 0.0
    %167 = vmatprep.subr.mxu0 0.0
    %168 = vmatpush1.msra.mxu0 0.0
    %169 = vmatprep.subr.mxu0 0.0
    %170 = vmatpush1.msra.mxu0 0.0
    %171 = vmatprep.subr.mxu0 0.0
    %172 = vmatpush1.msra.mxu0 0.0
    %173 = vmatprep.subr.mxu0 0.0
    %174 = vmatpush1.msra.mxu0 0.0
    %175 = vmatprep.subr.mxu0 0.0
    %176 = vmatpush1.msra.mxu0 0.0
    %177 = vmatprep.mubr.f32.mxu0 0.0
    %178 = vmatmul.mubr.f32.gmra.mrb[0].mxu0 %v111
    %v179 = vpop.f32.mrb[0].mxu0
    %v180 = vadd.f32 0.0, %v179
    %v181 = vpop.f32.mrb[0].mxu0
    %182 = vdwg.mxu0
    %vm183 = vcmask 97280
    %184 = vst.msk [vmem:[#allocation5] sm:$0xff] %vm183, %v180
    %s185 = scalar_lea.vmem [#allocation2], 16
    %v186 = vld [vmem:[%s185] sm:$0xff]
    %v187 = vld [vmem:[%s185 + $0x8] sm:$0xff]
    %188 = vmatprep.subr.mxu0 0.0
    %189 = vmatpush1.msra.mxu0 %v186
    %190 = vmatprep.subr.mxu0 0.0
    %191 = vmatpush1.msra.mxu0 %v187
    %192 = vmatprep.subr.mxu0 0.0
    %193 = vmatpush1.msra.mxu0 0.0
    %194 = vmatprep.subr.mxu0 0.0
    %195 = vmatpush1.msra.mxu0 0.0
    %196 = vmatprep.subr.mxu0 0.0
    %197 = vmatpush1.msra.mxu0 0.0
    %198 = vmatprep.subr.mxu0 0.0
    %199 = vmatpush1.msra.mxu0 0.0
    %200 = vmatprep.subr.mxu0 0.0
    %201 = vmatpush1.msra.mxu0 0.0
    %202 = vmatprep.subr.mxu0 0.0
    %203 = vmatpush1.msra.mxu0 0.0
    %204 = vmatprep.subr.mxu0 0.0
    %205 = vmatpush1.msra.mxu0 0.0
    %206 = vmatprep.subr.mxu0 0.0
    %207 = vmatpush1.msra.mxu0 0.0
    %208 = vmatprep.subr.mxu0 0.0
    %209 = vmatpush1.msra.mxu0 0.0
    %210 = vmatprep.subr.mxu0 0.0
    %211 = vmatpush1.msra.mxu0 0.0
    %212 = vmatprep.subr.mxu0 0.0
    %213 = vmatpush1.msra.mxu0 0.0
    %214 = vmatprep.subr.mxu0 0.0
    %215 = vmatpush1.msra.mxu0 0.0
    %216 = vmatprep.subr.mxu0 0.0
    %217 = vmatpush1.msra.mxu0 0.0
    %218 = vmatprep.subr.mxu0 0.0
    %219 = vmatpush1.msra.mxu0 0.0
    %220 = vmatprep.subr.mxu0 0.0
    %221 = vmatpush1.msra.mxu0 0.0
    %222 = vmatprep.subr.mxu0 0.0
    %223 = vmatpush1.msra.mxu0 0.0
    %224 = vmatprep.subr.mxu0 0.0
    %225 = vmatpush1.msra.mxu0 0.0
    %226 = vmatprep.subr.mxu0 0.0
    %227 = vmatpush1.msra.mxu0 0.0
    %228 = vmatprep.subr.mxu0 0.0
    %229 = vmatpush1.msra.mxu0 0.0
    %230 = vmatprep.subr.mxu0 0.0
    %231 = vmatpush1.msra.mxu0 0.0
    %232 = vmatprep.subr.mxu0 0.0
    %233 = vmatpush1.msra.mxu0 0.0
    %234 = vmatprep.subr.mxu0 0.0
    %235 = vmatpush1.msra.mxu0 0.0
    %236 = vmatprep.subr.mxu0 0.0
    %237 = vmatpush1.msra.mxu0 0.0
    %238 = vmatprep.subr.mxu0 0.0
    %239 = vmatpush1.msra.mxu0 0.0
    %240 = vmatprep.subr.mxu0 0.0
    %241 = vmatpush1.msra.mxu0 0.0
    %242 = vmatprep.subr.mxu0 0.0
    %243 = vmatpush1.msra.mxu0 0.0
    %244 = vmatprep.subr.mxu0 0.0
    %245 = vmatpush1.msra.mxu0 0.0
    %246 = vmatprep.subr.mxu0 0.0
    %247 = vmatpush1.msra.mxu0 0.0
    %248 = vmatprep.subr.mxu0 0.0
    %249 = vmatpush1.msra.mxu0 0.0
    %250 = vmatprep.subr.mxu0 0.0
    %251 = vmatpush1.msra.mxu0 0.0
    %252 = vmatprep.mubr.f32.mxu0 0.0
    %253 = vmatmul.mubr.f32.gmra.mrb[0].mxu0 %v37
    %v254 = vpop.f32.mrb[0].mxu0
    %v255 = vadd.f32 0.0, %v254
    %v256 = vpop.f32.mrb[0].mxu0
    %257 = vdwg.mxu0
    %v259 = vsel %vm109, %v255, 0
    %261 = vmatprep.subr.mxu0 0.0
    %262 = vmatpush1.msra.mxu0 %v30
    %263 = vmatprep.subr.mxu0 0.0
    %264 = vmatpush1.msra.mxu0 %v31
    %265 = vmatprep.subr.mxu0 0.0
    %266 = vmatpush1.msra.mxu0 %v32
    %267 = vmatprep.subr.mxu0 0.0
    %268 = vmatpush1.msra.mxu0 0.0
    %269 = vmatprep.subr.mxu0 0.0
    %270 = vmatpush1.msra.mxu0 0.0
    %271 = vmatprep.subr.mxu0 0.0
    %272 = vmatpush1.msra.mxu0 0.0
    %273 = vmatprep.subr.mxu0 0.0
    %274 = vmatpush1.msra.mxu0 0.0
    %275 = vmatprep.subr.mxu0 0.0
    %276 = vmatpush1.msra.mxu0 0.0
    %277 = vmatprep.subr.mxu0 0.0
    %278 = vmatpush1.msra.mxu0 0.0
    %279 = vmatprep.subr.mxu0 0.0
    %280 = vmatpush1.msra.mxu0 0.0
    %281 = vmatprep.subr.mxu0 0.0
    %282 = vmatpush1.msra.mxu0 0.0
    %283 = vmatprep.subr.mxu0 0.0
    %284 = vmatpush1.msra.mxu0 0.0
    %285 = vmatprep.subr.mxu0 0.0
    %286 = vmatpush1.msra.mxu0 0.0
    %287 = vmatprep.subr.mxu0 0.0
    %288 = vmatpush1.msra.mxu0 0.0
    %289 = vmatprep.subr.mxu0 0.0
    %290 = vmatpush1.msra.mxu0 0.0
    %291 = vmatprep.subr.mxu0 0.0
    %292 = vmatpush1.msra.mxu0 0.0
    %293 = vmatprep.subr.mxu0 0.0
    %294 = vmatpush1.msra.mxu0 0.0
    %295 = vmatprep.subr.mxu0 0.0
    %296 = vmatpush1.msra.mxu0 0.0
    %297 = vmatprep.subr.mxu0 0.0
    %298 = vmatpush1.msra.mxu0 0.0
    %299 = vmatprep.subr.mxu0 0.0
    %300 = vmatpush1.msra.mxu0 0.0
    %301 = vmatprep.subr.mxu0 0.0
    %302 = vmatpush1.msra.mxu0 0.0
    %303 = vmatprep.subr.mxu0 0.0
    %304 = vmatpush1.msra.mxu0 0.0
    %305 = vmatprep.subr.mxu0 0.0
    %306 = vmatpush1.msra.mxu0 0.0
    %307 = vmatprep.subr.mxu0 0.0
    %308 = vmatpush1.msra.mxu0 0.0
    %309 = vmatprep.subr.mxu0 0.0
    %310 = vmatpush1.msra.mxu0 0.0
    %311 = vmatprep.subr.mxu0 0.0
    %312 = vmatpush1.msra.mxu0 0.0
    %313 = vmatprep.subr.mxu0 0.0
    %314 = vmatpush1.msra.mxu0 0.0
    %315 = vmatprep.subr.mxu0 0.0
    %316 = vmatpush1.msra.mxu0 0.0
    %317 = vmatprep.subr.mxu0 0.0
    %318 = vmatpush1.msra.mxu0 0.0
    %319 = vmatprep.subr.mxu0 0.0
    %320 = vmatpush1.msra.mxu0 0.0
    %321 = vmatprep.subr.mxu0 0.0
    %322 = vmatpush1.msra.mxu0 0.0
    %323 = vmatprep.subr.mxu0 0.0
    %324 = vmatpush1.msra.mxu0 0.0
    %325 = vmatprep.mubr.f32.mxu0 0.0
    %326 = vmatmul.mubr.f32.gmra.mrb[0].mxu0 %v259
    %v327 = vpop.f32.mrb[0].mxu0
    %v328 = vadd.f32 0.0, %v327
    %v329 = vpop.f32.mrb[0].mxu0
    %330 = vdwg.mxu0
    %s331 = scalar_lea.vmem [#allocation5], 8
    %332 = vst.msk [vmem:[%s331] sm:$0xff] %vm183, %v328
    %s333 = scalar_lea.vmem [#allocation2], 32
    %v334 = vld [vmem:[%s333] sm:$0xff]
    %v335 = vld [vmem:[%s333 + $0x8] sm:$0xff]
    %336 = vmatprep.subr.mxu0 0.0
    %337 = vmatpush1.msra.mxu0 %v334
    %338 = vmatprep.subr.mxu0 0.0
    %339 = vmatpush1.msra.mxu0 %v335
    %340 = vmatprep.subr.mxu0 0.0
    %341 = vmatpush1.msra.mxu0 0.0
    %342 = vmatprep.subr.mxu0 0.0
    %343 = vmatpush1.msra.mxu0 0.0
    %344 = vmatprep.subr.mxu0 0.0
    %345 = vmatpush1.msra.mxu0 0.0
    %346 = vmatprep.subr.mxu0 0.0
    %347 = vmatpush1.msra.mxu0 0.0
    %348 = vmatprep.subr.mxu0 0.0
    %349 = vmatpush1.msra.mxu0 0.0
    %350 = vmatprep.subr.mxu0 0.0
    %351 = vmatpush1.msra.mxu0 0.0
    %352 = vmatprep.subr.mxu0 0.0
    %353 = vmatpush1.msra.mxu0 0.0
    %354 = vmatprep.subr.mxu0 0.0
    %355 = vmatpush1.msra.mxu0 0.0
    %356 = vmatprep.subr.mxu0 0.0
    %357 = vmatpush1.msra.mxu0 0.0
    %358 = vmatprep.subr.mxu0 0.0
    %359 = vmatpush1.msra.mxu0 0.0
    %360 = vmatprep.subr.mxu0 0.0
    %361 = vmatpush1.msra.mxu0 0.0
    %362 = vmatprep.subr.mxu0 0.0
    %363 = vmatpush1.msra.mxu0 0.0
    %364 = vmatprep.subr.mxu0 0.0
    %365 = vmatpush1.msra.mxu0 0.0
    %366 = vmatprep.subr.mxu0 0.0
    %367 = vmatpush1.msra.mxu0 0.0
    %368 = vmatprep.subr.mxu0 0.0
    %369 = vmatpush1.msra.mxu0 0.0
    %370 = vmatprep.subr.mxu0 0.0
    %371 = vmatpush1.msra.mxu0 0.0
    %372 = vmatprep.subr.mxu0 0.0
    %373 = vmatpush1.msra.mxu0 0.0
    %374 = vmatprep.subr.mxu0 0.0
    %375 = vmatpush1.msra.mxu0 0.0
    %376 = vmatprep.subr.mxu0 0.0
    %377 = vmatpush1.msra.mxu0 0.0
    %378 = vmatprep.subr.mxu0 0.0
    %379 = vmatpush1.msra.mxu0 0.0
    %380 = vmatprep.subr.mxu0 0.0
    %381 = vmatpush1.msra.mxu0 0.0
    %382 = vmatprep.subr.mxu0 0.0
    %383 = vmatpush1.msra.mxu0 0.0
    %384 = vmatprep.subr.mxu0 0.0
    %385 = vmatpush1.msra.mxu0 0.0
    %386 = vmatprep.subr.mxu0 0.0
    %387 = vmatpush1.msra.mxu0 0.0
    %388 = vmatprep.subr.mxu0 0.0
    %389 = vmatpush1.msra.mxu0 0.0
    %390 = vmatprep.subr.mxu0 0.0
    %391 = vmatpush1.msra.mxu0 0.0
    %392 = vmatprep.subr.mxu0 0.0
    %393 = vmatpush1.msra.mxu0 0.0
    %394 = vmatprep.subr.mxu0 0.0
    %395 = vmatpush1.msra.mxu0 0.0
    %396 = vmatprep.subr.mxu0 0.0
    %397 = vmatpush1.msra.mxu0 0.0
    %398 = vmatprep.subr.mxu0 0.0
    %399 = vmatpush1.msra.mxu0 0.0
    %400 = vmatprep.mubr.f32.mxu0 0.0
    %401 = vmatmul.mubr.f32.gmra.mrb[0].mxu0 %v37
    %v402 = vpop.f32.mrb[0].mxu0
    %v403 = vadd.f32 0.0, %v402
    %v404 = vpop.f32.mrb[0].mxu0
    %405 = vdwg.mxu0
    %v407 = vsel %vm109, %v403, 0
    %409 = vmatprep.subr.mxu0 0.0
    %410 = vmatpush1.msra.mxu0 %v30
    %411 = vmatprep.subr.mxu0 0.0
    %412 = vmatpush1.msra.mxu0 %v31
    %413 = vmatprep.subr.mxu0 0.0
    %414 = vmatpush1.msra.mxu0 %v32
    %415 = vmatprep.subr.mxu0 0.0
    %416 = vmatpush1.msra.mxu0 0.0
    %417 = vmatprep.subr.mxu0 0.0
    %418 = vmatpush1.msra.mxu0 0.0
    %419 = vmatprep.subr.mxu0 0.0
    %420 = vmatpush1.msra.mxu0 0.0
    %421 = vmatprep.subr.mxu0 0.0
    %422 = vmatpush1.msra.mxu0 0.0
    %423 = vmatprep.subr.mxu0 0.0
    %424 = vmatpush1.msra.mxu0 0.0
    %425 = vmatprep.subr.mxu0 0.0
    %426 = vmatpush1.msra.mxu0 0.0
    %427 = vmatprep.subr.mxu0 0.0
    %428 = vmatpush1.msra.mxu0 0.0
    %429 = vmatprep.subr.mxu0 0.0
    %430 = vmatpush1.msra.mxu0 0.0
    %431 = vmatprep.subr.mxu0 0.0
    %432 = vmatpush1.msra.mxu0 0.0
    %433 = vmatprep.subr.mxu0 0.0
    %434 = vmatpush1.msra.mxu0 0.0
    %435 = vmatprep.subr.mxu0 0.0
    %436 = vmatpush1.msra.mxu0 0.0
    %437 = vmatprep.subr.mxu0 0.0
    %438 = vmatpush1.msra.mxu0 0.0
    %439 = vmatprep.subr.mxu0 0.0
    %440 = vmatpush1.msra.mxu0 0.0
    %441 = vmatprep.subr.mxu0 0.0
    %442 = vmatpush1.msra.mxu0 0.0
    %443 = vmatprep.subr.mxu0 0.0
    %444 = vmatpush1.msra.mxu0 0.0
    %445 = vmatprep.subr.mxu0 0.0
    %446 = vmatpush1.msra.mxu0 0.0
    %447 = vmatprep.subr.mxu0 0.0
    %448 = vmatpush1.msra.mxu0 0.0
    %449 = vmatprep.subr.mxu0 0.0
    %450 = vmatpush1.msra.mxu0 0.0
    %451 = vmatprep.subr.mxu0 0.0
    %452 = vmatpush1.msra.mxu0 0.0
    %453 = vmatprep.subr.mxu0 0.0
    %454 = vmatpush1.msra.mxu0 0.0
    %455 = vmatprep.subr.mxu0 0.0
    %456 = vmatpush1.msra.mxu0 0.0
    %457 = vmatprep.subr.mxu0 0.0
    %458 = vmatpush1.msra.mxu0 0.0
    %459 = vmatprep.subr.mxu0 0.0
    %460 = vmatpush1.msra.mxu0 0.0
    %461 = vmatprep.subr.mxu0 0.0
    %462 = vmatpush1.msra.mxu0 0.0
    %463 = vmatprep.subr.mxu0 0.0
    %464 = vmatpush1.msra.mxu0 0.0
    %465 = vmatprep.subr.mxu0 0.0
    %466 = vmatpush1.msra.mxu0 0.0
    %467 = vmatprep.subr.mxu0 0.0
    %468 = vmatpush1.msra.mxu0 0.0
    %469 = vmatprep.subr.mxu0 0.0
    %470 = vmatpush1.msra.mxu0 0.0
    %471 = vmatprep.subr.mxu0 0.0
    %472 = vmatpush1.msra.mxu0 0.0
    %473 = vmatprep.mubr.f32.mxu0 0.0
    %474 = vmatmul.mubr.f32.gmra.mrb[0].mxu0 %v407
    %v475 = vpop.f32.mrb[0].mxu0
    %v476 = vadd.f32 0.0, %v475
    %v477 = vpop.f32.mrb[0].mxu0
    %478 = vdwg.mxu0
    %s479 = scalar_lea.vmem [#allocation5], 16
    %480 = vst.msk [vmem:[%s479] sm:$0xff] %vm183, %v476
    %s481 = scalar_lea.vmem [#allocation2], 48
    %v482 = vld [vmem:[%s481] sm:$0xff]
    %v483 = vld [vmem:[%s481 + $0x8] sm:$0xff]
    %484 = vmatprep.subr.mxu0 0.0
    %485 = vmatpush1.msra.mxu0 %v482
    %486 = vmatprep.subr.mxu0 0.0
    %487 = vmatpush1.msra.mxu0 %v483
    %488 = vmatprep.subr.mxu0 0.0
    %489 = vmatpush1.msra.mxu0 0.0
    %490 = vmatprep.subr.mxu0 0.0
    %491 = vmatpush1.msra.mxu0 0.0
    %492 = vmatprep.subr.mxu0 0.0
    %493 = vmatpush1.msra.mxu0 0.0
    %494 = vmatprep.subr.mxu0 0.0
    %495 = vmatpush1.msra.mxu0 0.0
    %496 = vmatprep.subr.mxu0 0.0
    %497 = vmatpush1.msra.mxu0 0.0
    %498 = vmatprep.subr.mxu0 0.0
    %499 = vmatpush1.msra.mxu0 0.0
    %500 = vmatprep.subr.mxu0 0.0
    %501 = vmatpush1.msra.mxu0 0.0
    %502 = vmatprep.subr.mxu0 0.0
    %503 = vmatpush1.msra.mxu0 0.0
    %504 = vmatprep.subr.mxu0 0.0
    %505 = vmatpush1.msra.mxu0 0.0
    %506 = vmatprep.subr.mxu0 0.0
    %507 = vmatpush1.msra.mxu0 0.0
    %508 = vmatprep.subr.mxu0 0.0
    %509 = vmatpush1.msra.mxu0 0.0
    %510 = vmatprep.subr.mxu0 0.0
    %511 = vmatpush1.msra.mxu0 0.0
    %512 = vmatprep.subr.mxu0 0.0
    %513 = vmatpush1.msra.mxu0 0.0
    %514 = vmatprep.subr.mxu0 0.0
    %515 = vmatpush1.msra.mxu0 0.0
    %516 = vmatprep.subr.mxu0 0.0
    %517 = vmatpush1.msra.mxu0 0.0
    %518 = vmatprep.subr.mxu0 0.0
    %519 = vmatpush1.msra.mxu0 0.0
    %520 = vmatprep.subr.mxu0 0.0
    %521 = vmatpush1.msra.mxu0 0.0
    %522 = vmatprep.subr.mxu0 0.0
    %523 = vmatpush1.msra.mxu0 0.0
    %524 = vmatprep.subr.mxu0 0.0
    %525 = vmatpush1.msra.mxu0 0.0
    %526 = vmatprep.subr.mxu0 0.0
    %527 = vmatpush1.msra.mxu0 0.0
    %528 = vmatprep.subr.mxu0 0.0
    %529 = vmatpush1.msra.mxu0 0.0
    %530 = vmatprep.subr.mxu0 0.0
    %531 = vmatpush1.msra.mxu0 0.0
    %532 = vmatprep.subr.mxu0 0.0
    %533 = vmatpush1.msra.mxu0 0.0
    %534 = vmatprep.subr.mxu0 0.0
    %535 = vmatpush1.msra.mxu0 0.0
    %536 = vmatprep.subr.mxu0 0.0
    %537 = vmatpush1.msra.mxu0 0.0
    %538 = vmatprep.subr.mxu0 0.0
    %539 = vmatpush1.msra.mxu0 0.0
    %540 = vmatprep.subr.mxu0 0.0
    %541 = vmatpush1.msra.mxu0 0.0
    %542 = vmatprep.subr.mxu0 0.0
    %543 = vmatpush1.msra.mxu0 0.0
    %544 = vmatprep.subr.mxu0 0.0
    %545 = vmatpush1.msra.mxu0 0.0
    %546 = vmatprep.subr.mxu0 0.0
    %547 = vmatpush1.msra.mxu0 0.0
    %548 = vmatprep.mubr.f32.mxu0 0.0
    %549 = vmatmul.mubr.f32.gmra.mrb[0].mxu0 %v37
    %v550 = vpop.f32.mrb[0].mxu0
    %v551 = vadd.f32 0.0, %v550
    %v552 = vpop.f32.mrb[0].mxu0
    %553 = vdwg.mxu0
    %v555 = vsel %vm109, %v551, 0
    %557 = vmatprep.subr.mxu0 0.0
    %558 = vmatpush1.msra.mxu0 %v30
    %559 = vmatprep.subr.mxu0 0.0
    %560 = vmatpush1.msra.mxu0 %v31
    %561 = vmatprep.subr.mxu0 0.0
    %562 = vmatpush1.msra.mxu0 %v32
    %563 = vmatprep.subr.mxu0 0.0
    %564 = vmatpush1.msra.mxu0 0.0
    %565 = vmatprep.subr.mxu0 0.0
    %566 = vmatpush1.msra.mxu0 0.0
    %567 = vmatprep.subr.mxu0 0.0
    %568 = vmatpush1.msra.mxu0 0.0
    %569 = vmatprep.subr.mxu0 0.0
    %570 = vmatpush1.msra.mxu0 0.0
    %571 = vmatprep.subr.mxu0 0.0
    %572 = vmatpush1.msra.mxu0 0.0
    %573 = vmatprep.subr.mxu0 0.0
    %574 = vmatpush1.msra.mxu0 0.0
    %575 = vmatprep.subr.mxu0 0.0
    %576 = vmatpush1.msra.mxu0 0.0
    %577 = vmatprep.subr.mxu0 0.0
    %578 = vmatpush1.msra.mxu0 0.0
    %579 = vmatprep.subr.mxu0 0.0
    %580 = vmatpush1.msra.mxu0 0.0
    %581 = vmatprep.subr.mxu0 0.0
    %582 = vmatpush1.msra.mxu0 0.0
    %583 = vmatprep.subr.mxu0 0.0
    %584 = vmatpush1.msra.mxu0 0.0
    %585 = vmatprep.subr.mxu0 0.0
    %586 = vmatpush1.msra.mxu0 0.0
    %587 = vmatprep.subr.mxu0 0.0
    %588 = vmatpush1.msra.mxu0 0.0
    %589 = vmatprep.subr.mxu0 0.0
    %590 = vmatpush1.msra.mxu0 0.0
    %591 = vmatprep.subr.mxu0 0.0
    %592 = vmatpush1.msra.mxu0 0.0
    %593 = vmatprep.subr.mxu0 0.0
    %594 = vmatpush1.msra.mxu0 0.0
    %595 = vmatprep.subr.mxu0 0.0
    %596 = vmatpush1.msra.mxu0 0.0
    %597 = vmatprep.subr.mxu0 0.0
    %598 = vmatpush1.msra.mxu0 0.0
    %599 = vmatprep.subr.mxu0 0.0
    %600 = vmatpush1.msra.mxu0 0.0
    %601 = vmatprep.subr.mxu0 0.0
    %602 = vmatpush1.msra.mxu0 0.0
    %603 = vmatprep.subr.mxu0 0.0
    %604 = vmatpush1.msra.mxu0 0.0
    %605 = vmatprep.subr.mxu0 0.0
    %606 = vmatpush1.msra.mxu0 0.0
    %607 = vmatprep.subr.mxu0 0.0
    %608 = vmatpush1.msra.mxu0 0.0
    %609 = vmatprep.subr.mxu0 0.0
    %610 = vmatpush1.msra.mxu0 0.0
    %611 = vmatprep.subr.mxu0 0.0
    %612 = vmatpush1.msra.mxu0 0.0
    %613 = vmatprep.subr.mxu0 0.0
    %614 = vmatpush1.msra.mxu0 0.0
    %615 = vmatprep.subr.mxu0 0.0
    %616 = vmatpush1.msra.mxu0 0.0
    %617 = vmatprep.subr.mxu0 0.0
    %618 = vmatpush1.msra.mxu0 0.0
    %619 = vmatprep.subr.mxu0 0.0
    %620 = vmatpush1.msra.mxu0 0.0
    %621 = vmatprep.mubr.f32.mxu0 0.0
    %622 = vmatmul.mubr.f32.gmra.mrb[0].mxu0 %v555
    %v623 = vpop.f32.mrb[0].mxu0
    %v624 = vadd.f32 0.0, %v623
    %v625 = vpop.f32.mrb[0].mxu0
    %626 = vdwg.mxu0
    %s627 = scalar_lea.vmem [#allocation5], 24
    %628 = vst.msk [vmem:[%s627] sm:$0xff] %vm183, %v624
    %s629 = scalar_lea.vmem [#allocation2], 64
    %v630 = vld [vmem:[%s629] sm:$0xff]
    %v631 = vld [vmem:[%s629 + $0x8] sm:$0xff]
    %632 = vmatprep.subr.mxu0 0.0
    %633 = vmatpush1.msra.mxu0 %v630
    %634 = vmatprep.subr.mxu0 0.0
    %635 = vmatpush1.msra.mxu0 %v631
    %636 = vmatprep.subr.mxu0 0.0
    %637 = vmatpush1.msra.mxu0 0.0
    %638 = vmatprep.subr.mxu0 0.0
    %639 = vmatpush1.msra.mxu0 0.0
    %640 = vmatprep.subr.mxu0 0.0
    %641 = vmatpush1.msra.mxu0 0.0
    %642 = vmatprep.subr.mxu0 0.0
    %643 = vmatpush1.msra.mxu0 0.0
    %644 = vmatprep.subr.mxu0 0.0
    %645 = vmatpush1.msra.mxu0 0.0
    %646 = vmatprep.subr.mxu0 0.0
    %647 = vmatpush1.msra.mxu0 0.0
    %648 = vmatprep.subr.mxu0 0.0
    %649 = vmatpush1.msra.mxu0 0.0
    %650 = vmatprep.subr.mxu0 0.0
    %651 = vmatpush1.msra.mxu0 0.0
    %652 = vmatprep.subr.mxu0 0.0
    %653 = vmatpush1.msra.mxu0 0.0
    %654 = vmatprep.subr.mxu0 0.0
    %655 = vmatpush1.msra.mxu0 0.0
    %656 = vmatprep.subr.mxu0 0.0
    %657 = vmatpush1.msra.mxu0 0.0
    %658 = vmatprep.subr.mxu0 0.0
    %659 = vmatpush1.msra.mxu0 0.0
    %660 = vmatprep.subr.mxu0 0.0
    %661 = vmatpush1.msra.mxu0 0.0
    %662 = vmatprep.subr.mxu0 0.0
    %663 = vmatpush1.msra.mxu0 0.0
    %664 = vmatprep.subr.mxu0 0.0
    %665 = vmatpush1.msra.mxu0 0.0
    %666 = vmatprep.subr.mxu0 0.0
    %667 = vmatpush1.msra.mxu0 0.0
    %668 = vmatprep.subr.mxu0 0.0
    %669 = vmatpush1.msra.mxu0 0.0
    %670 = vmatprep.subr.mxu0 0.0
    %671 = vmatpush1.msra.mxu0 0.0
    %672 = vmatprep.subr.mxu0 0.0
    %673 = vmatpush1.msra.mxu0 0.0
    %674 = vmatprep.subr.mxu0 0.0
    %675 = vmatpush1.msra.mxu0 0.0
    %676 = vmatprep.subr.mxu0 0.0
    %677 = vmatpush1.msra.mxu0 0.0
    %678 = vmatprep.subr.mxu0 0.0
    %679 = vmatpush1.msra.mxu0 0.0
    %680 = vmatprep.subr.mxu0 0.0
    %681 = vmatpush1.msra.mxu0 0.0
    %682 = vmatprep.subr.mxu0 0.0
    %683 = vmatpush1.msra.mxu0 0.0
    %684 = vmatprep.subr.mxu0 0.0
    %685 = vmatpush1.msra.mxu0 0.0
    %686 = vmatprep.subr.mxu0 0.0
    %687 = vmatpush1.msra.mxu0 0.0
    %688 = vmatprep.subr.mxu0 0.0
    %689 = vmatpush1.msra.mxu0 0.0
    %690 = vmatprep.subr.mxu0 0.0
    %691 = vmatpush1.msra.mxu0 0.0
    %692 = vmatprep.subr.mxu0 0.0
    %693 = vmatpush1.msra.mxu0 0.0
    %694 = vmatprep.subr.mxu0 0.0
    %695 = vmatpush1.msra.mxu0 0.0
    %696 = vmatprep.mubr.f32.mxu0 0.0
    %697 = vmatmul.mubr.f32.gmra.mrb[0].mxu0 %v37
    %v698 = vpop.f32.mrb[0].mxu0
    %v699 = vadd.f32 0.0, %v698
    %v700 = vpop.f32.mrb[0].mxu0
    %701 = vdwg.mxu0
    %v703 = vsel %vm109, %v699, 0
    %705 = vmatprep.subr.mxu0 0.0
    %706 = vmatpush1.msra.mxu0 %v30
    %707 = vmatprep.subr.mxu0 0.0
    %708 = vmatpush1.msra.mxu0 %v31
    %709 = vmatprep.subr.mxu0 0.0
    %710 = vmatpush1.msra.mxu0 %v32
    %711 = vmatprep.subr.mxu0 0.0
    %712 = vmatpush1.msra.mxu0 0.0
    %713 = vmatprep.subr.mxu0 0.0
    %714 = vmatpush1.msra.mxu0 0.0
    %715 = vmatprep.subr.mxu0 0.0
    %716 = vmatpush1.msra.mxu0 0.0
    %717 = vmatprep.subr.mxu0 0.0
    %718 = vmatpush1.msra.mxu0 0.0
    %719 = vmatprep.subr.mxu0 0.0
    %720 = vmatpush1.msra.mxu0 0.0
    %721 = vmatprep.subr.mxu0 0.0
    %722 = vmatpush1.msra.mxu0 0.0
    %723 = vmatprep.subr.mxu0 0.0
    %724 = vmatpush1.msra.mxu0 0.0
    %725 = vmatprep.subr.mxu0 0.0
    %726 = vmatpush1.msra.mxu0 0.0
    %727 = vmatprep.subr.mxu0 0.0
    %728 = vmatpush1.msra.mxu0 0.0
    %729 = vmatprep.subr.mxu0 0.0
    %730 = vmatpush1.msra.mxu0 0.0
    %731 = vmatprep.subr.mxu0 0.0
    %732 = vmatpush1.msra.mxu0 0.0
    %733 = vmatprep.subr.mxu0 0.0
    %734 = vmatpush1.msra.mxu0 0.0
    %735 = vmatprep.subr.mxu0 0.0
    %736 = vmatpush1.msra.mxu0 0.0
    %737 = vmatprep.subr.mxu0 0.0
    %738 = vmatpush1.msra.mxu0 0.0
    %739 = vmatprep.subr.mxu0 0.0
    %740 = vmatpush1.msra.mxu0 0.0
    %741 = vmatprep.subr.mxu0 0.0
    %742 = vmatpush1.msra.mxu0 0.0
    %743 = vmatprep.subr.mxu0 0.0
    %744 = vmatpush1.msra.mxu0 0.0
    %745 = vmatprep.subr.mxu0 0.0
    %746 = vmatpush1.msra.mxu0 0.0
    %747 = vmatprep.subr.mxu0 0.0
    %748 = vmatpush1.msra.mxu0 0.0
    %749 = vmatprep.subr.mxu0 0.0
    %750 = vmatpush1.msra.mxu0 0.0
    %751 = vmatprep.subr.mxu0 0.0
    %752 = vmatpush1.msra.mxu0 0.0
    %753 = vmatprep.subr.mxu0 0.0
    %754 = vmatpush1.msra.mxu0 0.0
    %755 = vmatprep.subr.mxu0 0.0
    %756 = vmatpush1.msra.mxu0 0.0
    %757 = vmatprep.subr.mxu0 0.0
    %758 = vmatpush1.msra.mxu0 0.0
    %759 = vmatprep.subr.mxu0 0.0
    %760 = vmatpush1.msra.mxu0 0.0
    %761 = vmatprep.subr.mxu0 0.0
    %762 = vmatpush1.msra.mxu0 0.0
    %763 = vmatprep.subr.mxu0 0.0
    %764 = vmatpush1.msra.mxu0 0.0
    %765 = vmatprep.subr.mxu0 0.0
    %766 = vmatpush1.msra.mxu0 0.0
    %767 = vmatprep.subr.mxu0 0.0
    %768 = vmatpush1.msra.mxu0 0.0
    %769 = vmatprep.mubr.f32.mxu0 0.0
    %770 = vmatmul.mubr.f32.gmra.mrb[0].mxu0 %v703
    %v771 = vpop.f32.mrb[0].mxu0
    %v772 = vadd.f32 0.0, %v771
    %v773 = vpop.f32.mrb[0].mxu0
    %774 = vdwg.mxu0
    %s775 = scalar_lea.vmem [#allocation5], 32
    %776 = vst.msk [vmem:[%s775] sm:$0xff] %vm183, %v772
    %s777 = scalar_lea.vmem [#allocation2], 80
    %v778 = vld [vmem:[%s777] sm:$0xff]
    %v779 = vld [vmem:[%s777 + $0x8] sm:$0xff]
    %780 = vmatprep.subr.mxu0 0.0
    %781 = vmatpush1.msra.mxu0 %v778
    %782 = vmatprep.subr.mxu0 0.0
    %783 = vmatpush1.msra.mxu0 %v779
    %784 = vmatprep.subr.mxu0 0.0
    %785 = vmatpush1.msra.mxu0 0.0
    %786 = vmatprep.subr.mxu0 0.0
    %787 = vmatpush1.msra.mxu0 0.0
    %788 = vmatprep.subr.mxu0 0.0
    %789 = vmatpush1.msra.mxu0 0.0
    %790 = vmatprep.subr.mxu0 0.0
    %791 = vmatpush1.msra.mxu0 0.0
    %792 = vmatprep.subr.mxu0 0.0
    %793 = vmatpush1.msra.mxu0 0.0
    %794 = vmatprep.subr.mxu0 0.0
    %795 = vmatpush1.msra.mxu0 0.0
    %796 = vmatprep.subr.mxu0 0.0
    %797 = vmatpush1.msra.mxu0 0.0
    %798 = vmatprep.subr.mxu0 0.0
    %799 = vmatpush1.msra.mxu0 0.0
    %800 = vmatprep.subr.mxu0 0.0
    %801 = vmatpush1.msra.mxu0 0.0
    %802 = vmatprep.subr.mxu0 0.0
    %803 = vmatpush1.msra.mxu0 0.0
    %804 = vmatprep.subr.mxu0 0.0
    %805 = vmatpush1.msra.mxu0 0.0
    %806 = vmatprep.subr.mxu0 0.0
    %807 = vmatpush1.msra.mxu0 0.0
    %808 = vmatprep.subr.mxu0 0.0
    %809 = vmatpush1.msra.mxu0 0.0
    %810 = vmatprep.subr.mxu0 0.0
    %811 = vmatpush1.msra.mxu0 0.0
    %812 = vmatprep.subr.mxu0 0.0
    %813 = vmatpush1.msra.mxu0 0.0
    %814 = vmatprep.subr.mxu0 0.0
    %815 = vmatpush1.msra.mxu0 0.0
    %816 = vmatprep.subr.mxu0 0.0
    %817 = vmatpush1.msra.mxu0 0.0
    %818 = vmatprep.subr.mxu0 0.0
    %819 = vmatpush1.msra.mxu0 0.0
    %820 = vmatprep.subr.mxu0 0.0
    %821 = vmatpush1.msra.mxu0 0.0
    %822 = vmatprep.subr.mxu0 0.0
    %823 = vmatpush1.msra.mxu0 0.0
    %824 = vmatprep.subr.mxu0 0.0
    %825 = vmatpush1.msra.mxu0 0.0
    %826 = vmatprep.subr.mxu0 0.0
    %827 = vmatpush1.msra.mxu0 0.0
    %828 = vmatprep.subr.mxu0 0.0
    %829 = vmatpush1.msra.mxu0 0.0
    %830 = vmatprep.subr.mxu0 0.0
    %831 = vmatpush1.msra.mxu0 0.0
    %832 = vmatprep.subr.mxu0 0.0
    %833 = vmatpush1.msra.mxu0 0.0
    %834 = vmatprep.subr.mxu0 0.0
    %835 = vmatpush1.msra.mxu0 0.0
    %836 = vmatprep.subr.mxu0 0.0
    %837 = vmatpush1.msra.mxu0 0.0
    %838 = vmatprep.subr.mxu0 0.0
    %839 = vmatpush1.msra.mxu0 0.0
    %840 = vmatprep.subr.mxu0 0.0
    %841 = vmatpush1.msra.mxu0 0.0
    %842 = vmatprep.subr.mxu0 0.0
    %843 = vmatpush1.msra.mxu0 0.0
    %844 = vmatprep.mubr.f32.mxu0 0.0
    %845 = vmatmul.mubr.f32.gmra.mrb[0].mxu0 %v37
    %v846 = vpop.f32.mrb[0].mxu0
    %v847 = vadd.f32 0.0, %v846
    %v848 = vpop.f32.mrb[0].mxu0
    %849 = vdwg.mxu0
    %v851 = vsel %vm109, %v847, 0
    %853 = vmatprep.subr.mxu0 0.0
    %854 = vmatpush1.msra.mxu0 %v30
    %855 = vmatprep.subr.mxu0 0.0
    %856 = vmatpush1.msra.mxu0 %v31
    %857 = vmatprep.subr.mxu0 0.0
    %858 = vmatpush1.msra.mxu0 %v32
    %859 = vmatprep.subr.mxu0 0.0
    %860 = vmatpush1.msra.mxu0 0.0
    %861 = vmatprep.subr.mxu0 0.0
    %862 = vmatpush1.msra.mxu0 0.0
    %863 = vmatprep.subr.mxu0 0.0
    %864 = vmatpush1.msra.mxu0 0.0
    %865 = vmatprep.subr.mxu0 0.0
    %866 = vmatpush1.msra.mxu0 0.0
    %867 = vmatprep.subr.mxu0 0.0
    %868 = vmatpush1.msra.mxu0 0.0
    %869 = vmatprep.subr.mxu0 0.0
    %870 = vmatpush1.msra.mxu0 0.0
    %871 = vmatprep.subr.mxu0 0.0
    %872 = vmatpush1.msra.mxu0 0.0
    %873 = vmatprep.subr.mxu0 0.0
    %874 = vmatpush1.msra.mxu0 0.0
    %875 = vmatprep.subr.mxu0 0.0
    %876 = vmatpush1.msra.mxu0 0.0
    %877 = vmatprep.subr.mxu0 0.0
    %878 = vmatpush1.msra.mxu0 0.0
    %879 = vmatprep.subr.mxu0 0.0
    %880 = vmatpush1.msra.mxu0 0.0
    %881 = vmatprep.subr.mxu0 0.0
    %882 = vmatpush1.msra.mxu0 0.0
    %883 = vmatprep.subr.mxu0 0.0
    %884 = vmatpush1.msra.mxu0 0.0
    %885 = vmatprep.subr.mxu0 0.0
    %886 = vmatpush1.msra.mxu0 0.0
    %887 = vmatprep.subr.mxu0 0.0
    %888 = vmatpush1.msra.mxu0 0.0
    %889 = vmatprep.subr.mxu0 0.0
    %890 = vmatpush1.msra.mxu0 0.0
    %891 = vmatprep.subr.mxu0 0.0
    %892 = vmatpush1.msra.mxu0 0.0
    %893 = vmatprep.subr.mxu0 0.0
    %894 = vmatpush1.msra.mxu0 0.0
    %895 = vmatprep.subr.mxu0 0.0
    %896 = vmatpush1.msra.mxu0 0.0
    %897 = vmatprep.subr.mxu0 0.0
    %898 = vmatpush1.msra.mxu0 0.0
    %899 = vmatprep.subr.mxu0 0.0
    %900 = vmatpush1.msra.mxu0 0.0
    %901 = vmatprep.subr.mxu0 0.0
    %902 = vmatpush1.msra.mxu0 0.0
    %903 = vmatprep.subr.mxu0 0.0
    %904 = vmatpush1.msra.mxu0 0.0
    %905 = vmatprep.subr.mxu0 0.0
    %906 = vmatpush1.msra.mxu0 0.0
    %907 = vmatprep.subr.mxu0 0.0
    %908 = vmatpush1.msra.mxu0 0.0
    %909 = vmatprep.subr.mxu0 0.0
    %910 = vmatpush1.msra.mxu0 0.0
    %911 = vmatprep.subr.mxu0 0.0
    %912 = vmatpush1.msra.mxu0 0.0
    %913 = vmatprep.subr.mxu0 0.0
    %914 = vmatpush1.msra.mxu0 0.0
    %915 = vmatprep.subr.mxu0 0.0
    %916 = vmatpush1.msra.mxu0 0.0
    %917 = vmatprep.mubr.f32.mxu0 0.0
    %918 = vmatmul.mubr.f32.gmra.mrb[0].mxu0 %v851
    %v919 = vpop.f32.mrb[0].mxu0
    %v920 = vadd.f32 0.0, %v919
    %v921 = vpop.f32.mrb[0].mxu0
    %922 = vdwg.mxu0
    %s923 = scalar_lea.vmem [#allocation5], 40
    %924 = vst.msk [vmem:[%s923] sm:$0xff] %vm183, %v920
    %s925 = scalar_lea.vmem [#allocation2], 96
    %v926 = vld [vmem:[%s925] sm:$0xff]
    %v927 = vld [vmem:[%s925 + $0x8] sm:$0xff]
    %928 = vmatprep.subr.mxu0 0.0
    %929 = vmatpush1.msra.mxu0 %v926
    %930 = vmatprep.subr.mxu0 0.0
    %931 = vmatpush1.msra.mxu0 %v927
    %932 = vmatprep.subr.mxu0 0.0
    %933 = vmatpush1.msra.mxu0 0.0
    %934 = vmatprep.subr.mxu0 0.0
    %935 = vmatpush1.msra.mxu0 0.0
    %936 = vmatprep.subr.mxu0 0.0
    %937 = vmatpush1.msra.mxu0 0.0
    %938 = vmatprep.subr.mxu0 0.0
    %939 = vmatpush1.msra.mxu0 0.0
    %940 = vmatprep.subr.mxu0 0.0
    %941 = vmatpush1.msra.mxu0 0.0
    %942 = vmatprep.subr.mxu0 0.0
    %943 = vmatpush1.msra.mxu0 0.0
    %944 = vmatprep.subr.mxu0 0.0
    %945 = vmatpush1.msra.mxu0 0.0
    %946 = vmatprep.subr.mxu0 0.0
    %947 = vmatpush1.msra.mxu0 0.0
    %948 = vmatprep.subr.mxu0 0.0
    %949 = vmatpush1.msra.mxu0 0.0
    %950 = vmatprep.subr.mxu0 0.0
    %951 = vmatpush1.msra.mxu0 0.0
    %952 = vmatprep.subr.mxu0 0.0
    %953 = vmatpush1.msra.mxu0 0.0
    %954 = vmatprep.subr.mxu0 0.0
    %955 = vmatpush1.msra.mxu0 0.0
    %956 = vmatprep.subr.mxu0 0.0
    %957 = vmatpush1.msra.mxu0 0.0
    %958 = vmatprep.subr.mxu0 0.0
    %959 = vmatpush1.msra.mxu0 0.0
    %960 = vmatprep.subr.mxu0 0.0
    %961 = vmatpush1.msra.mxu0 0.0
    %962 = vmatprep.subr.mxu0 0.0
    %963 = vmatpush1.msra.mxu0 0.0
    %964 = vmatprep.subr.mxu0 0.0
    %965 = vmatpush1.msra.mxu0 0.0
    %966 = vmatprep.subr.mxu0 0.0
    %967 = vmatpush1.msra.mxu0 0.0
    %968 = vmatprep.subr.mxu0 0.0
    %969 = vmatpush1.msra.mxu0 0.0
    %970 = vmatprep.subr.mxu0 0.0
    %971 = vmatpush1.msra.mxu0 0.0
    %972 = vmatprep.subr.mxu0 0.0
    %973 = vmatpush1.msra.mxu0 0.0
    %974 = vmatprep.subr.mxu0 0.0
    %975 = vmatpush1.msra.mxu0 0.0
    %976 = vmatprep.subr.mxu0 0.0
    %977 = vmatpush1.msra.mxu0 0.0
    %978 = vmatprep.subr.mxu0 0.0
    %979 = vmatpush1.msra.mxu0 0.0
    %980 = vmatprep.subr.mxu0 0.0
    %981 = vmatpush1.msra.mxu0 0.0
    %982 = vmatprep.subr.mxu0 0.0
    %983 = vmatpush1.msra.mxu0 0.0
    %984 = vmatprep.subr.mxu0 0.0
    %985 = vmatpush1.msra.mxu0 0.0
    %986 = vmatprep.subr.mxu0 0.0
    %987 = vmatpush1.msra.mxu0 0.0
    %988 = vmatprep.subr.mxu0 0.0
    %989 = vmatpush1.msra.mxu0 0.0
    %990 = vmatprep.subr.mxu0 0.0
    %991 = vmatpush1.msra.mxu0 0.0
    %992 = vmatprep.mubr.f32.mxu0 0.0
    %993 = vmatmul.mubr.f32.gmra.mrb[0].mxu0 %v37
    %v994 = vpop.f32.mrb[0].mxu0
    %v995 = vadd.f32 0.0, %v994
    %v996 = vpop.f32.mrb[0].mxu0
    %997 = vdwg.mxu0
    %v999 = vsel %vm109, %v995, 0
    %1001 = vmatprep.subr.mxu0 0.0
    %1002 = vmatpush1.msra.mxu0 %v30
    %1003 = vmatprep.subr.mxu0 0.0
    %1004 = vmatpush1.msra.mxu0 %v31
    %1005 = vmatprep.subr.mxu0 0.0
    %1006 = vmatpush1.msra.mxu0 %v32
    %1007 = vmatprep.subr.mxu0 0.0
    %1008 = vmatpush1.msra.mxu0 0.0
    %1009 = vmatprep.subr.mxu0 0.0
    %1010 = vmatpush1.msra.mxu0 0.0
    %1011 = vmatprep.subr.mxu0 0.0
    %1012 = vmatpush1.msra.mxu0 0.0
    %1013 = vmatprep.subr.mxu0 0.0
    %1014 = vmatpush1.msra.mxu0 0.0
    %1015 = vmatprep.subr.mxu0 0.0
    %1016 = vmatpush1.msra.mxu0 0.0
    %1017 = vmatprep.subr.mxu0 0.0
    %1018 = vmatpush1.msra.mxu0 0.0
    %1019 = vmatprep.subr.mxu0 0.0
    %1020 = vmatpush1.msra.mxu0 0.0
    %1021 = vmatprep.subr.mxu0 0.0
    %1022 = vmatpush1.msra.mxu0 0.0
    %1023 = vmatprep.subr.mxu0 0.0
    %1024 = vmatpush1.msra.mxu0 0.0
    %1025 = vmatprep.subr.mxu0 0.0
    %1026 = vmatpush1.msra.mxu0 0.0
    %1027 = vmatprep.subr.mxu0 0.0
    %1028 = vmatpush1.msra.mxu0 0.0
    %1029 = vmatprep.subr.mxu0 0.0
    %1030 = vmatpush1.msra.mxu0 0.0
    %1031 = vmatprep.subr.mxu0 0.0
    %1032 = vmatpush1.msra.mxu0 0.0
    %1033 = vmatprep.subr.mxu0 0.0
    %1034 = vmatpush1.msra.mxu0 0.0
    %1035 = vmatprep.subr.mxu0 0.0
    %1036 = vmatpush1.msra.mxu0 0.0
    %1037 = vmatprep.subr.mxu0 0.0
    %1038 = vmatpush1.msra.mxu0 0.0
    %1039 = vmatprep.subr.mxu0 0.0
    %1040 = vmatpush1.msra.mxu0 0.0
    %1041 = vmatprep.subr.mxu0 0.0
    %1042 = vmatpush1.msra.mxu0 0.0
    %1043 = vmatprep.subr.mxu0 0.0
    %1044 = vmatpush1.msra.mxu0 0.0
    %1045 = vmatprep.subr.mxu0 0.0
    %1046 = vmatpush1.msra.mxu0 0.0
    %1047 = vmatprep.subr.mxu0 0.0
    %1048 = vmatpush1.msra.mxu0 0.0
    %1049 = vmatprep.subr.mxu0 0.0
    %1050 = vmatpush1.msra.mxu0 0.0
    %1051 = vmatprep.subr.mxu0 0.0
    %1052 = vmatpush1.msra.mxu0 0.0
    %1053 = vmatprep.subr.mxu0 0.0
    %1054 = vmatpush1.msra.mxu0 0.0
    %1055 = vmatprep.subr.mxu0 0.0
    %1056 = vmatpush1.msra.mxu0 0.0
    %1057 = vmatprep.subr.mxu0 0.0
    %1058 = vmatpush1.msra.mxu0 0.0
    %1059 = vmatprep.subr.mxu0 0.0
    %1060 = vmatpush1.msra.mxu0 0.0
    %1061 = vmatprep.subr.mxu0 0.0
    %1062 = vmatpush1.msra.mxu0 0.0
    %1063 = vmatprep.subr.mxu0 0.0
    %1064 = vmatpush1.msra.mxu0 0.0
    %1065 = vmatprep.mubr.f32.mxu0 0.0
    %1066 = vmatmul.mubr.f32.gmra.mrb[0].mxu0 %v999
    %v1067 = vpop.f32.mrb[0].mxu0
    %v1068 = vadd.f32 0.0, %v1067
    %v1069 = vpop.f32.mrb[0].mxu0
    %1070 = vdwg.mxu0
    %s1071 = scalar_lea.vmem [#allocation5], 48
    %1072 = vst.msk [vmem:[%s1071] sm:$0xff] %vm183, %v1068
    %s1073 = scalar_lea.vmem [#allocation2], 112
    %v1074 = vld [vmem:[%s1073] sm:$0xff]
    %v1075 = vld [vmem:[%s1073 + $0x8] sm:$0xff]
    %1076 = vmatprep.subr.mxu0 0.0
    %1077 = vmatpush1.msra.mxu0 %v1074
    %1078 = vmatprep.subr.mxu0 0.0
    %1079 = vmatpush1.msra.mxu0 %v1075
    %1080 = vmatprep.subr.mxu0 0.0
    %1081 = vmatpush1.msra.mxu0 0.0
    %1082 = vmatprep.subr.mxu0 0.0
    %1083 = vmatpush1.msra.mxu0 0.0
    %1084 = vmatprep.subr.mxu0 0.0
    %1085 = vmatpush1.msra.mxu0 0.0
    %1086 = vmatprep.subr.mxu0 0.0
    %1087 = vmatpush1.msra.mxu0 0.0
    %1088 = vmatprep.subr.mxu0 0.0
    %1089 = vmatpush1.msra.mxu0 0.0
    %1090 = vmatprep.subr.mxu0 0.0
    %1091 = vmatpush1.msra.mxu0 0.0
    %1092 = vmatprep.subr.mxu0 0.0
    %1093 = vmatpush1.msra.mxu0 0.0
    %1094 = vmatprep.subr.mxu0 0.0
    %1095 = vmatpush1.msra.mxu0 0.0
    %1096 = vmatprep.subr.mxu0 0.0
    %1097 = vmatpush1.msra.mxu0 0.0
    %1098 = vmatprep.subr.mxu0 0.0
    %1099 = vmatpush1.msra.mxu0 0.0
    %1100 = vmatprep.subr.mxu0 0.0
    %1101 = vmatpush1.msra.mxu0 0.0
    %1102 = vmatprep.subr.mxu0 0.0
    %1103 = vmatpush1.msra.mxu0 0.0
    %1104 = vmatprep.subr.mxu0 0.0
    %1105 = vmatpush1.msra.mxu0 0.0
    %1106 = vmatprep.subr.mxu0 0.0
    %1107 = vmatpush1.msra.mxu0 0.0
    %1108 = vmatprep.subr.mxu0 0.0
    %1109 = vmatpush1.msra.mxu0 0.0
    %1110 = vmatprep.subr.mxu0 0.0
    %1111 = vmatpush1.msra.mxu0 0.0
    %1112 = vmatprep.subr.mxu0 0.0
    %1113 = vmatpush1.msra.mxu0 0.0
    %1114 = vmatprep.subr.mxu0 0.0
    %1115 = vmatpush1.msra.mxu0 0.0
    %1116 = vmatprep.subr.mxu0 0.0
    %1117 = vmatpush1.msra.mxu0 0.0
    %1118 = vmatprep.subr.mxu0 0.0
    %1119 = vmatpush1.msra.mxu0 0.0
    %1120 = vmatprep.subr.mxu0 0.0
    %1121 = vmatpush1.msra.mxu0 0.0
    %1122 = vmatprep.subr.mxu0 0.0
    %1123 = vmatpush1.msra.mxu0 0.0
    %1124 = vmatprep.subr.mxu0 0.0
    %1125 = vmatpush1.msra.mxu0 0.0
    %1126 = vmatprep.subr.mxu0 0.0
    %1127 = vmatpush1.msra.mxu0 0.0
    %1128 = vmatprep.subr.mxu0 0.0
    %1129 = vmatpush1.msra.mxu0 0.0
    %1130 = vmatprep.subr.mxu0 0.0
    %1131 = vmatpush1.msra.mxu0 0.0
    %1132 = vmatprep.subr.mxu0 0.0
    %1133 = vmatpush1.msra.mxu0 0.0
    %1134 = vmatprep.subr.mxu0 0.0
    %1135 = vmatpush1.msra.mxu0 0.0
    %1136 = vmatprep.subr.mxu0 0.0
    %1137 = vmatpush1.msra.mxu0 0.0
    %1138 = vmatprep.subr.mxu0 0.0
    %1139 = vmatpush1.msra.mxu0 0.0
    %1140 = vmatprep.mubr.f32.mxu0 0.0
    %1141 = vmatmul.mubr.f32.gmra.mrb[0].mxu0 %v37
    %v1142 = vpop.f32.mrb[0].mxu0
    %v1143 = vadd.f32 0.0, %v1142
    %v1144 = vpop.f32.mrb[0].mxu0
    %1145 = vdwg.mxu0
    %v1147 = vsel %vm109, %v1143, 0
    %1149 = vmatprep.subr.mxu0 0.0
    %1150 = vmatpush1.msra.mxu0 %v30
    %1151 = vmatprep.subr.mxu0 0.0
    %1152 = vmatpush1.msra.mxu0 %v31
    %1153 = vmatprep.subr.mxu0 0.0
    %1154 = vmatpush1.msra.mxu0 %v32
    %1155 = vmatprep.subr.mxu0 0.0
    %1156 = vmatpush1.msra.mxu0 0.0
    %1157 = vmatprep.subr.mxu0 0.0
    %1158 = vmatpush1.msra.mxu0 0.0
    %1159 = vmatprep.subr.mxu0 0.0
    %1160 = vmatpush1.msra.mxu0 0.0
    %1161 = vmatprep.subr.mxu0 0.0
    %1162 = vmatpush1.msra.mxu0 0.0
    %1163 = vmatprep.subr.mxu0 0.0
    %1164 = vmatpush1.msra.mxu0 0.0
    %1165 = vmatprep.subr.mxu0 0.0
    %1166 = vmatpush1.msra.mxu0 0.0
    %1167 = vmatprep.subr.mxu0 0.0
    %1168 = vmatpush1.msra.mxu0 0.0
    %1169 = vmatprep.subr.mxu0 0.0
    %1170 = vmatpush1.msra.mxu0 0.0
    %1171 = vmatprep.subr.mxu0 0.0
    %1172 = vmatpush1.msra.mxu0 0.0
    %1173 = vmatprep.subr.mxu0 0.0
    %1174 = vmatpush1.msra.mxu0 0.0
    %1175 = vmatprep.subr.mxu0 0.0
    %1176 = vmatpush1.msra.mxu0 0.0
    %1177 = vmatprep.subr.mxu0 0.0
    %1178 = vmatpush1.msra.mxu0 0.0
    %1179 = vmatprep.subr.mxu0 0.0
    %1180 = vmatpush1.msra.mxu0 0.0
    %1181 = vmatprep.subr.mxu0 0.0
    %1182 = vmatpush1.msra.mxu0 0.0
    %1183 = vmatprep.subr.mxu0 0.0
    %1184 = vmatpush1.msra.mxu0 0.0
    %1185 = vmatprep.subr.mxu0 0.0
    %1186 = vmatpush1.msra.mxu0 0.0
    %1187 = vmatprep.subr.mxu0 0.0
    %1188 = vmatpush1.msra.mxu0 0.0
    %1189 = vmatprep.subr.mxu0 0.0
    %1190 = vmatpush1.msra.mxu0 0.0
    %1191 = vmatprep.subr.mxu0 0.0
    %1192 = vmatpush1.msra.mxu0 0.0
    %1193 = vmatprep.subr.mxu0 0.0
    %1194 = vmatpush1.msra.mxu0 0.0
    %1195 = vmatprep.subr.mxu0 0.0
    %1196 = vmatpush1.msra.mxu0 0.0
    %1197 = vmatprep.subr.mxu0 0.0
    %1198 = vmatpush1.msra.mxu0 0.0
    %1199 = vmatprep.subr.mxu0 0.0
    %1200 = vmatpush1.msra.mxu0 0.0
    %1201 = vmatprep.subr.mxu0 0.0
    %1202 = vmatpush1.msra.mxu0 0.0
    %1203 = vmatprep.subr.mxu0 0.0
    %1204 = vmatpush1.msra.mxu0 0.0
    %1205 = vmatprep.subr.mxu0 0.0
    %1206 = vmatpush1.msra.mxu0 0.0
    %1207 = vmatprep.subr.mxu0 0.0
    %1208 = vmatpush1.msra.mxu0 0.0
    %1209 = vmatprep.subr.mxu0 0.0
    %1210 = vmatpush1.msra.mxu0 0.0
    %1211 = vmatprep.subr.mxu0 0.0
    %1212 = vmatpush1.msra.mxu0 0.0
    %1213 = vmatprep.mubr.f32.mxu0 0.0
    %1214 = vmatmul.mubr.f32.gmra.mrb[0].mxu0 %v1147
    %v1215 = vpop.f32.mrb[0].mxu0
    %v1216 = vadd.f32 0.0, %v1215
    %v1217 = vpop.f32.mrb[0].mxu0
    %1218 = vdwg.mxu0
    %s1219 = scalar_lea.vmem [#allocation5], 56
    %1220 = vst.msk [vmem:[%s1219] sm:$0xff] %vm183, %v1216
    %s1221 = scalar_lea.vmem [#allocation2], 128
    %v1222 = vld [vmem:[%s1221] sm:$0xff]
    %v1223 = vld [vmem:[%s1221 + $0x8] sm:$0xff]
    %1224 = vmatprep.subr.mxu0 0.0
    %1225 = vmatpush1.msra.mxu0 %v1222
    %1226 = vmatprep.subr.mxu0 0.0
    %1227 = vmatpush1.msra.mxu0 %v1223
    %1228 = vmatprep.subr.mxu0 0.0
    %1229 = vmatpush1.msra.mxu0 0.0
    %1230 = vmatprep.subr.mxu0 0.0
    %1231 = vmatpush1.msra.mxu0 0.0
    %1232 = vmatprep.subr.mxu0 0.0
    %1233 = vmatpush1.msra.mxu0 0.0
    %1234 = vmatprep.subr.mxu0 0.0
    %1235 = vmatpush1.msra.mxu0 0.0
    %1236 = vmatprep.subr.mxu0 0.0
    %1237 = vmatpush1.msra.mxu0 0.0
    %1238 = vmatprep.subr.mxu0 0.0
    %1239 = vmatpush1.msra.mxu0 0.0
    %1240 = vmatprep.subr.mxu0 0.0
    %1241 = vmatpush1.msra.mxu0 0.0
    %1242 = vmatprep.subr.mxu0 0.0
    %1243 = vmatpush1.msra.mxu0 0.0
    %1244 = vmatprep.subr.mxu0 0.0
    %1245 = vmatpush1.msra.mxu0 0.0
    %1246 = vmatprep.subr.mxu0 0.0
    %1247 = vmatpush1.msra.mxu0 0.0
    %1248 = vmatprep.subr.mxu0 0.0
    %1249 = vmatpush1.msra.mxu0 0.0
    %1250 = vmatprep.subr.mxu0 0.0
    %1251 = vmatpush1.msra.mxu0 0.0
    %1252 = vmatprep.subr.mxu0 0.0
    %1253 = vmatpush1.msra.mxu0 0.0
    %1254 = vmatprep.subr.mxu0 0.0
    %1255 = vmatpush1.msra.mxu0 0.0
    %1256 = vmatprep.subr.mxu0 0.0
    %1257 = vmatpush1.msra.mxu0 0.0
    %1258 = vmatprep.subr.mxu0 0.0
    %1259 = vmatpush1.msra.mxu0 0.0
    %1260 = vmatprep.subr.mxu0 0.0
    %1261 = vmatpush1.msra.mxu0 0.0
    %1262 = vmatprep.subr.mxu0 0.0
    %1263 = vmatpush1.msra.mxu0 0.0
    %1264 = vmatprep.subr.mxu0 0.0
    %1265 = vmatpush1.msra.mxu0 0.0
    %1266 = vmatprep.subr.mxu0 0.0
    %1267 = vmatpush1.msra.mxu0 0.0
    %1268 = vmatprep.subr.mxu0 0.0
    %1269 = vmatpush1.msra.mxu0 0.0
    %1270 = vmatprep.subr.mxu0 0.0
    %1271 = vmatpush1.msra.mxu0 0.0
    %1272 = vmatprep.subr.mxu0 0.0
    %1273 = vmatpush1.msra.mxu0 0.0
    %1274 = vmatprep.subr.mxu0 0.0
    %1275 = vmatpush1.msra.mxu0 0.0
    %1276 = vmatprep.subr.mxu0 0.0
    %1277 = vmatpush1.msra.mxu0 0.0
    %1278 = vmatprep.subr.mxu0 0.0
    %1279 = vmatpush1.msra.mxu0 0.0
    %1280 = vmatprep.subr.mxu0 0.0
    %1281 = vmatpush1.msra.mxu0 0.0
    %1282 = vmatprep.subr.mxu0 0.0
    %1283 = vmatpush1.msra.mxu0 0.0
    %1284 = vmatprep.subr.mxu0 0.0
    %1285 = vmatpush1.msra.mxu0 0.0
    %1286 = vmatprep.subr.mxu0 0.0
    %1287 = vmatpush1.msra.mxu0 0.0
    %1288 = vmatprep.mubr.f32.mxu0 0.0
    %1289 = vmatmul.mubr.f32.gmra.mrb[0].mxu0 %v37
    %v1290 = vpop.f32.mrb[0].mxu0
    %v1291 = vadd.f32 0.0, %v1290
    %v1292 = vpop.f32.mrb[0].mxu0
    %1293 = vdwg.mxu0
    %v1295 = vsel %vm109, %v1291, 0
    %1297 = vmatprep.subr.mxu0 0.0
    %1298 = vmatpush1.msra.mxu0 %v30
    %1299 = vmatprep.subr.mxu0 0.0
    %1300 = vmatpush1.msra.mxu0 %v31
    %1301 = vmatprep.subr.mxu0 0.0
    %1302 = vmatpush1.msra.mxu0 %v32
    %1303 = vmatprep.subr.mxu0 0.0
    %1304 = vmatpush1.msra.mxu0 0.0
    %1305 = vmatprep.subr.mxu0 0.0
    %1306 = vmatpush1.msra.mxu0 0.0
    %1307 = vmatprep.subr.mxu0 0.0
    %1308 = vmatpush1.msra.mxu0 0.0
    %1309 = vmatprep.subr.mxu0 0.0
    %1310 = vmatpush1.msra.mxu0 0.0
    %1311 = vmatprep.subr.mxu0 0.0
    %1312 = vmatpush1.msra.mxu0 0.0
    %1313 = vmatprep.subr.mxu0 0.0
    %1314 = vmatpush1.msra.mxu0 0.0
    %1315 = vmatprep.subr.mxu0 0.0
    %1316 = vmatpush1.msra.mxu0 0.0
    %1317 = vmatprep.subr.mxu0 0.0
    %1318 = vmatpush1.msra.mxu0 0.0
    %1319 = vmatprep.subr.mxu0 0.0
    %1320 = vmatpush1.msra.mxu0 0.0
    %1321 = vmatprep.subr.mxu0 0.0
    %1322 = vmatpush1.msra.mxu0 0.0
    %1323 = vmatprep.subr.mxu0 0.0
    %1324 = vmatpush1.msra.mxu0 0.0
    %1325 = vmatprep.subr.mxu0 0.0
    %1326 = vmatpush1.msra.mxu0 0.0
    %1327 = vmatprep.subr.mxu0 0.0
    %1328 = vmatpush1.msra.mxu0 0.0
    %1329 = vmatprep.subr.mxu0 0.0
    %1330 = vmatpush1.msra.mxu0 0.0
    %1331 = vmatprep.subr.mxu0 0.0
    %1332 = vmatpush1.msra.mxu0 0.0
    %1333 = vmatprep.subr.mxu0 0.0
    %1334 = vmatpush1.msra.mxu0 0.0
    %1335 = vmatprep.subr.mxu0 0.0
    %1336 = vmatpush1.msra.mxu0 0.0
    %1337 = vmatprep.subr.mxu0 0.0
    %1338 = vmatpush1.msra.mxu0 0.0
    %1339 = vmatprep.subr.mxu0 0.0
    %1340 = vmatpush1.msra.mxu0 0.0
    %1341 = vmatprep.subr.mxu0 0.0
    %1342 = vmatpush1.msra.mxu0 0.0
    %1343 = vmatprep.subr.mxu0 0.0
    %1344 = vmatpush1.msra.mxu0 0.0
    %1345 = vmatprep.subr.mxu0 0.0
    %1346 = vmatpush1.msra.mxu0 0.0
    %1347 = vmatprep.subr.mxu0 0.0
    %1348 = vmatpush1.msra.mxu0 0.0
    %1349 = vmatprep.subr.mxu0 0.0
    %1350 = vmatpush1.msra.mxu0 0.0
    %1351 = vmatprep.subr.mxu0 0.0
    %1352 = vmatpush1.msra.mxu0 0.0
    %1353 = vmatprep.subr.mxu0 0.0
    %1354 = vmatpush1.msra.mxu0 0.0
    %1355 = vmatprep.subr.mxu0 0.0
    %1356 = vmatpush1.msra.mxu0 0.0
    %1357 = vmatprep.subr.mxu0 0.0
    %1358 = vmatpush1.msra.mxu0 0.0
    %1359 = vmatprep.subr.mxu0 0.0
    %1360 = vmatpush1.msra.mxu0 0.0
    %1361 = vmatprep.mubr.f32.mxu0 0.0
    %1362 = vmatmul.mubr.f32.gmra.mrb[0].mxu0 %v1295
    %v1363 = vpop.f32.mrb[0].mxu0
    %v1364 = vadd.f32 0.0, %v1363
    %v1365 = vpop.f32.mrb[0].mxu0
    %1366 = vdwg.mxu0
    %s1367 = scalar_lea.vmem [#allocation5], 64
    %1368 = vst.msk [vmem:[%s1367] sm:$0xff] %vm183, %v1364
    %s1369 = scalar_lea.vmem [#allocation2], 144
    %v1370 = vld [vmem:[%s1369] sm:$0xff]
    %v1371 = vld [vmem:[%s1369 + $0x8] sm:$0xff]
    %1372 = vmatprep.subr.mxu0 0.0
    %1373 = vmatpush1.msra.mxu0 %v1370
    %1374 = vmatprep.subr.mxu0 0.0
    %1375 = vmatpush1.msra.mxu0 %v1371
    %1376 = vmatprep.subr.mxu0 0.0
    %1377 = vmatpush1.msra.mxu0 0.0
    %1378 = vmatprep.subr.mxu0 0.0
    %1379 = vmatpush1.msra.mxu0 0.0
    %1380 = vmatprep.subr.mxu0 0.0
    %1381 = vmatpush1.msra.mxu0 0.0
    %1382 = vmatprep.subr.mxu0 0.0
    %1383 = vmatpush1.msra.mxu0 0.0
    %1384 = vmatprep.subr.mxu0 0.0
    %1385 = vmatpush1.msra.mxu0 0.0
    %1386 = vmatprep.subr.mxu0 0.0
    %1387 = vmatpush1.msra.mxu0 0.0
    %1388 = vmatprep.subr.mxu0 0.0
    %1389 = vmatpush1.msra.mxu0 0.0
    %1390 = vmatprep.subr.mxu0 0.0
    %1391 = vmatpush1.msra.mxu0 0.0
    %1392 = vmatprep.subr.mxu0 0.0
    %1393 = vmatpush1.msra.mxu0 0.0
    %1394 = vmatprep.subr.mxu0 0.0
    %1395 = vmatpush1.msra.mxu0 0.0
    %1396 = vmatprep.subr.mxu0 0.0
    %1397 = vmatpush1.msra.mxu0 0.0
    %1398 = vmatprep.subr.mxu0 0.0
    %1399 = vmatpush1.msra.mxu0 0.0
    %1400 = vmatprep.subr.mxu0 0.0
    %1401 = vmatpush1.msra.mxu0 0.0
    %1402 = vmatprep.subr.mxu0 0.0
    %1403 = vmatpush1.msra.mxu0 0.0
    %1404 = vmatprep.subr.mxu0 0.0
    %1405 = vmatpush1.msra.mxu0 0.0
    %1406 = vmatprep.subr.mxu0 0.0
    %1407 = vmatpush1.msra.mxu0 0.0
    %1408 = vmatprep.subr.mxu0 0.0
    %1409 = vmatpush1.msra.mxu0 0.0
    %1410 = vmatprep.subr.mxu0 0.0
    %1411 = vmatpush1.msra.mxu0 0.0
    %1412 = vmatprep.subr.mxu0 0.0
    %1413 = vmatpush1.msra.mxu0 0.0
    %1414 = vmatprep.subr.mxu0 0.0
    %1415 = vmatpush1.msra.mxu0 0.0
    %1416 = vmatprep.subr.mxu0 0.0
    %1417 = vmatpush1.msra.mxu0 0.0
    %1418 = vmatprep.subr.mxu0 0.0
    %1419 = vmatpush1.msra.mxu0 0.0
    %1420 = vmatprep.subr.mxu0 0.0
    %1421 = vmatpush1.msra.mxu0 0.0
    %1422 = vmatprep.subr.mxu0 0.0
    %1423 = vmatpush1.msra.mxu0 0.0
    %1424 = vmatprep.subr.mxu0 0.0
    %1425 = vmatpush1.msra.mxu0 0.0
    %1426 = vmatprep.subr.mxu0 0.0
    %1427 = vmatpush1.msra.mxu0 0.0
    %1428 = vmatprep.subr.mxu0 0.0
    %1429 = vmatpush1.msra.mxu0 0.0
    %1430 = vmatprep.subr.mxu0 0.0
    %1431 = vmatpush1.msra.mxu0 0.0
    %1432 = vmatprep.subr.mxu0 0.0
    %1433 = vmatpush1.msra.mxu0 0.0
    %1434 = vmatprep.subr.mxu0 0.0
    %1435 = vmatpush1.msra.mxu0 0.0
    %1436 = vmatprep.mubr.f32.mxu0 0.0
    %1437 = vmatmul.mubr.f32.gmra.mrb[0].mxu0 %v37
    %v1438 = vpop.f32.mrb[0].mxu0
    %v1439 = vadd.f32 0.0, %v1438
    %v1440 = vpop.f32.mrb[0].mxu0
    %1441 = vdwg.mxu0
    %v1443 = vsel %vm109, %v1439, 0
    %1445 = vmatprep.subr.mxu0 0.0
    %1446 = vmatpush1.msra.mxu0 %v30
    %1447 = vmatprep.subr.mxu0 0.0
    %1448 = vmatpush1.msra.mxu0 %v31
    %1449 = vmatprep.subr.mxu0 0.0
    %1450 = vmatpush1.msra.mxu0 %v32
    %1451 = vmatprep.subr.mxu0 0.0
    %1452 = vmatpush1.msra.mxu0 0.0
    %1453 = vmatprep.subr.mxu0 0.0
    %1454 = vmatpush1.msra.mxu0 0.0
    %1455 = vmatprep.subr.mxu0 0.0
    %1456 = vmatpush1.msra.mxu0 0.0
    %1457 = vmatprep.subr.mxu0 0.0
    %1458 = vmatpush1.msra.mxu0 0.0
    %1459 = vmatprep.subr.mxu0 0.0
    %1460 = vmatpush1.msra.mxu0 0.0
    %1461 = vmatprep.subr.mxu0 0.0
    %1462 = vmatpush1.msra.mxu0 0.0
    %1463 = vmatprep.subr.mxu0 0.0
    %1464 = vmatpush1.msra.mxu0 0.0
    %1465 = vmatprep.subr.mxu0 0.0
    %1466 = vmatpush1.msra.mxu0 0.0
    %1467 = vmatprep.subr.mxu0 0.0
    %1468 = vmatpush1.msra.mxu0 0.0
    %1469 = vmatprep.subr.mxu0 0.0
    %1470 = vmatpush1.msra.mxu0 0.0
    %1471 = vmatprep.subr.mxu0 0.0
    %1472 = vmatpush1.msra.mxu0 0.0
    %1473 = vmatprep.subr.mxu0 0.0
    %1474 = vmatpush1.msra.mxu0 0.0
    %1475 = vmatprep.subr.mxu0 0.0
    %1476 = vmatpush1.msra.mxu0 0.0
    %1477 = vmatprep.subr.mxu0 0.0
    %1478 = vmatpush1.msra.mxu0 0.0
    %1479 = vmatprep.subr.mxu0 0.0
    %1480 = vmatpush1.msra.mxu0 0.0
    %1481 = vmatprep.subr.mxu0 0.0
    %1482 = vmatpush1.msra.mxu0 0.0
    %1483 = vmatprep.subr.mxu0 0.0
    %1484 = vmatpush1.msra.mxu0 0.0
    %1485 = vmatprep.subr.mxu0 0.0
    %1486 = vmatpush1.msra.mxu0 0.0
    %1487 = vmatprep.subr.mxu0 0.0
    %1488 = vmatpush1.msra.mxu0 0.0
    %1489 = vmatprep.subr.mxu0 0.0
    %1490 = vmatpush1.msra.mxu0 0.0
    %1491 = vmatprep.subr.mxu0 0.0
    %1492 = vmatpush1.msra.mxu0 0.0
    %1493 = vmatprep.subr.mxu0 0.0
    %1494 = vmatpush1.msra.mxu0 0.0
    %1495 = vmatprep.subr.mxu0 0.0
    %1496 = vmatpush1.msra.mxu0 0.0
    %1497 = vmatprep.subr.mxu0 0.0
    %1498 = vmatpush1.msra.mxu0 0.0
    %1499 = vmatprep.subr.mxu0 0.0
    %1500 = vmatpush1.msra.mxu0 0.0
    %1501 = vmatprep.subr.mxu0 0.0
    %1502 = vmatpush1.msra.mxu0 0.0
    %1503 = vmatprep.subr.mxu0 0.0
    %1504 = vmatpush1.msra.mxu0 0.0
    %1505 = vmatprep.subr.mxu0 0.0
    %1506 = vmatpush1.msra.mxu0 0.0
    %1507 = vmatprep.subr.mxu0 0.0
    %1508 = vmatpush1.msra.mxu0 0.0
    %1509 = vmatprep.mubr.f32.mxu0 0.0
    %1510 = vmatmul.mubr.f32.gmra.mrb[0].mxu0 %v1443
    %v1511 = vpop.f32.mrb[0].mxu0
    %v1512 = vadd.f32 0.0, %v1511
    %v1513 = vpop.f32.mrb[0].mxu0
    %1514 = vdwg.mxu0
    %s1515 = scalar_lea.vmem [#allocation5], 72
    %1516 = vst.msk [vmem:[%s1515] sm:$0xff] %vm183, %v1512
    %s1517 = scalar_lea.vmem [#allocation2], 160
    %v1518 = vld [vmem:[%s1517] sm:$0xff]
    %v1519 = vld [vmem:[%s1517 + $0x8] sm:$0xff]
    %1520 = vmatprep.subr.mxu0 0.0
    %1521 = vmatpush1.msra.mxu0 %v1518
    %1522 = vmatprep.subr.mxu0 0.0
    %1523 = vmatpush1.msra.mxu0 %v1519
    %1524 = vmatprep.subr.mxu0 0.0
    %1525 = vmatpush1.msra.mxu0 0.0
    %1526 = vmatprep.subr.mxu0 0.0
    %1527 = vmatpush1.msra.mxu0 0.0
    %1528 = vmatprep.subr.mxu0 0.0
    %1529 = vmatpush1.msra.mxu0 0.0
    %1530 = vmatprep.subr.mxu0 0.0
    %1531 = vmatpush1.msra.mxu0 0.0
    %1532 = vmatprep.subr.mxu0 0.0
    %1533 = vmatpush1.msra.mxu0 0.0
    %1534 = vmatprep.subr.mxu0 0.0
    %1535 = vmatpush1.msra.mxu0 0.0
    %1536 = vmatprep.subr.mxu0 0.0
    %1537 = vmatpush1.msra.mxu0 0.0
    %1538 = vmatprep.subr.mxu0 0.0
    %1539 = vmatpush1.msra.mxu0 0.0
    %1540 = vmatprep.subr.mxu0 0.0
    %1541 = vmatpush1.msra.mxu0 0.0
    %1542 = vmatprep.subr.mxu0 0.0
    %1543 = vmatpush1.msra.mxu0 0.0
    %1544 = vmatprep.subr.mxu0 0.0
    %1545 = vmatpush1.msra.mxu0 0.0
    %1546 = vmatprep.subr.mxu0 0.0
    %1547 = vmatpush1.msra.mxu0 0.0
    %1548 = vmatprep.subr.mxu0 0.0
    %1549 = vmatpush1.msra.mxu0 0.0
    %1550 = vmatprep.subr.mxu0 0.0
    %1551 = vmatpush1.msra.mxu0 0.0
    %1552 = vmatprep.subr.mxu0 0.0
    %1553 = vmatpush1.msra.mxu0 0.0
    %1554 = vmatprep.subr.mxu0 0.0
    %1555 = vmatpush1.msra.mxu0 0.0
    %1556 = vmatprep.subr.mxu0 0.0
    %1557 = vmatpush1.msra.mxu0 0.0
    %1558 = vmatprep.subr.mxu0 0.0
    %1559 = vmatpush1.msra.mxu0 0.0
    %1560 = vmatprep.subr.mxu0 0.0
    %1561 = vmatpush1.msra.mxu0 0.0
    %1562 = vmatprep.subr.mxu0 0.0
    %1563 = vmatpush1.msra.mxu0 0.0
    %1564 = vmatprep.subr.mxu0 0.0
    %1565 = vmatpush1.msra.mxu0 0.0
    %1566 = vmatprep.subr.mxu0 0.0
    %1567 = vmatpush1.msra.mxu0 0.0
    %1568 = vmatprep.subr.mxu0 0.0
    %1569 = vmatpush1.msra.mxu0 0.0
    %1570 = vmatprep.subr.mxu0 0.0
    %1571 = vmatpush1.msra.mxu0 0.0
    %1572 = vmatprep.subr.mxu0 0.0
    %1573 = vmatpush1.msra.mxu0 0.0
    %1574 = vmatprep.subr.mxu0 0.0
    %1575 = vmatpush1.msra.mxu0 0.0
    %1576 = vmatprep.subr.mxu0 0.0
    %1577 = vmatpush1.msra.mxu0 0.0
    %1578 = vmatprep.subr.mxu0 0.0
    %1579 = vmatpush1.msra.mxu0 0.0
    %1580 = vmatprep.subr.mxu0 0.0
    %1581 = vmatpush1.msra.mxu0 0.0
    %1582 = vmatprep.subr.mxu0 0.0
    %1583 = vmatpush1.msra.mxu0 0.0
    %1584 = vmatprep.mubr.f32.mxu0 0.0
    %1585 = vmatmul.mubr.f32.gmra.mrb[0].mxu0 %v37
    %v1586 = vpop.f32.mrb[0].mxu0
    %v1587 = vadd.f32 0.0, %v1586
    %v1588 = vpop.f32.mrb[0].mxu0
    %1589 = vdwg.mxu0
    %v1591 = vsel %vm109, %v1587, 0
    %1593 = vmatprep.subr.mxu0 0.0
    %1594 = vmatpush1.msra.mxu0 %v30
    %1595 = vmatprep.subr.mxu0 0.0
    %1596 = vmatpush1.msra.mxu0 %v31
    %1597 = vmatprep.subr.mxu0 0.0
    %1598 = vmatpush1.msra.mxu0 %v32
    %1599 = vmatprep.subr.mxu0 0.0
    %1600 = vmatpush1.msra.mxu0 0.0
    %1601 = vmatprep.subr.mxu0 0.0
    %1602 = vmatpush1.msra.mxu0 0.0
    %1603 = vmatprep.subr.mxu0 0.0
    %1604 = vmatpush1.msra.mxu0 0.0
    %1605 = vmatprep.subr.mxu0 0.0
    %1606 = vmatpush1.msra.mxu0 0.0
    %1607 = vmatprep.subr.mxu0 0.0
    %1608 = vmatpush1.msra.mxu0 0.0
    %1609 = vmatprep.subr.mxu0 0.0
    %1610 = vmatpush1.msra.mxu0 0.0
    %1611 = vmatprep.subr.mxu0 0.0
    %1612 = vmatpush1.msra.mxu0 0.0
    %1613 = vmatprep.subr.mxu0 0.0
    %1614 = vmatpush1.msra.mxu0 0.0
    %1615 = vmatprep.subr.mxu0 0.0
    %1616 = vmatpush1.msra.mxu0 0.0
    %1617 = vmatprep.subr.mxu0 0.0
    %1618 = vmatpush1.msra.mxu0 0.0
    %1619 = vmatprep.subr.mxu0 0.0
    %1620 = vmatpush1.msra.mxu0 0.0
    %1621 = vmatprep.subr.mxu0 0.0
    %1622 = vmatpush1.msra.mxu0 0.0
    %1623 = vmatprep.subr.mxu0 0.0
    %1624 = vmatpush1.msra.mxu0 0.0
    %1625 = vmatprep.subr.mxu0 0.0
    %1626 = vmatpush1.msra.mxu0 0.0
    %1627 = vmatprep.subr.mxu0 0.0
    %1628 = vmatpush1.msra.mxu0 0.0
    %1629 = vmatprep.subr.mxu0 0.0
    %1630 = vmatpush1.msra.mxu0 0.0
    %1631 = vmatprep.subr.mxu0 0.0
    %1632 = vmatpush1.msra.mxu0 0.0
    %1633 = vmatprep.subr.mxu0 0.0
    %1634 = vmatpush1.msra.mxu0 0.0
    %1635 = vmatprep.subr.mxu0 0.0
    %1636 = vmatpush1.msra.mxu0 0.0
    %1637 = vmatprep.subr.mxu0 0.0
    %1638 = vmatpush1.msra.mxu0 0.0
    %1639 = vmatprep.subr.mxu0 0.0
    %1640 = vmatpush1.msra.mxu0 0.0
    %1641 = vmatprep.subr.mxu0 0.0
    %1642 = vmatpush1.msra.mxu0 0.0
    %1643 = vmatprep.subr.mxu0 0.0
    %1644 = vmatpush1.msra.mxu0 0.0
    %1645 = vmatprep.subr.mxu0 0.0
    %1646 = vmatpush1.msra.mxu0 0.0
    %1647 = vmatprep.subr.mxu0 0.0
    %1648 = vmatpush1.msra.mxu0 0.0
    %1649 = vmatprep.subr.mxu0 0.0
    %1650 = vmatpush1.msra.mxu0 0.0
    %1651 = vmatprep.subr.mxu0 0.0
    %1652 = vmatpush1.msra.mxu0 0.0
    %1653 = vmatprep.subr.mxu0 0.0
    %1654 = vmatpush1.msra.mxu0 0.0
    %1655 = vmatprep.subr.mxu0 0.0
    %1656 = vmatpush1.msra.mxu0 0.0
    %1657 = vmatprep.mubr.f32.mxu0 0.0
    %1658 = vmatmul.mubr.f32.gmra.mrb[0].mxu0 %v1591
    %v1659 = vpop.f32.mrb[0].mxu0
    %v1660 = vadd.f32 0.0, %v1659
    %v1661 = vpop.f32.mrb[0].mxu0
    %1662 = vdwg.mxu0
    %s1663 = scalar_lea.vmem [#allocation5], 80
    %1664 = vst.msk [vmem:[%s1663] sm:$0xff] %vm183, %v1660
    %s1665 = scalar_lea.vmem [#allocation2], 176
    %v1666 = vld [vmem:[%s1665] sm:$0xff]
    %v1667 = vld [vmem:[%s1665 + $0x8] sm:$0xff]
    %1668 = vmatprep.subr.mxu0 0.0
    %1669 = vmatpush1.msra.mxu0 %v1666
    %1670 = vmatprep.subr.mxu0 0.0
    %1671 = vmatpush1.msra.mxu0 %v1667
    %1672 = vmatprep.subr.mxu0 0.0
    %1673 = vmatpush1.msra.mxu0 0.0
    %1674 = vmatprep.subr.mxu0 0.0
    %1675 = vmatpush1.msra.mxu0 0.0
    %1676 = vmatprep.subr.mxu0 0.0
    %1677 = vmatpush1.msra.mxu0 0.0
    %1678 = vmatprep.subr.mxu0 0.0
    %1679 = vmatpush1.msra.mxu0 0.0
    %1680 = vmatprep.subr.mxu0 0.0
    %1681 = vmatpush1.msra.mxu0 0.0
    %1682 = vmatprep.subr.mxu0 0.0
    %1683 = vmatpush1.msra.mxu0 0.0
    %1684 = vmatprep.subr.mxu0 0.0
    %1685 = vmatpush1.msra.mxu0 0.0
    %1686 = vmatprep.subr.mxu0 0.0
    %1687 = vmatpush1.msra.mxu0 0.0
    %1688 = vmatprep.subr.mxu0 0.0
    %1689 = vmatpush1.msra.mxu0 0.0
    %1690 = vmatprep.subr.mxu0 0.0
    %1691 = vmatpush1.msra.mxu0 0.0
    %1692 = vmatprep.subr.mxu0 0.0
    %1693 = vmatpush1.msra.mxu0 0.0
    %1694 = vmatprep.subr.mxu0 0.0
    %1695 = vmatpush1.msra.mxu0 0.0
    %1696 = vmatprep.subr.mxu0 0.0
    %1697 = vmatpush1.msra.mxu0 0.0
    %1698 = vmatprep.subr.mxu0 0.0
    %1699 = vmatpush1.msra.mxu0 0.0
    %1700 = vmatprep.subr.mxu0 0.0
    %1701 = vmatpush1.msra.mxu0 0.0
    %1702 = vmatprep.subr.mxu0 0.0
    %1703 = vmatpush1.msra.mxu0 0.0
    %1704 = vmatprep.subr.mxu0 0.0
    %1705 = vmatpush1.msra.mxu0 0.0
    %1706 = vmatprep.subr.mxu0 0.0
    %1707 = vmatpush1.msra.mxu0 0.0
    %1708 = vmatprep.subr.mxu0 0.0
    %1709 = vmatpush1.msra.mxu0 0.0
    %1710 = vmatprep.subr.mxu0 0.0
    %1711 = vmatpush1.msra.mxu0 0.0
    %1712 = vmatprep.subr.mxu0 0.0
    %1713 = vmatpush1.msra.mxu0 0.0
    %1714 = vmatprep.subr.mxu0 0.0
    %1715 = vmatpush1.msra.mxu0 0.0
    %1716 = vmatprep.subr.mxu0 0.0
    %1717 = vmatpush1.msra.mxu0 0.0
    %1718 = vmatprep.subr.mxu0 0.0
    %1719 = vmatpush1.msra.mxu0 0.0
    %1720 = vmatprep.subr.mxu0 0.0
    %1721 = vmatpush1.msra.mxu0 0.0
    %1722 = vmatprep.subr.mxu0 0.0
    %1723 = vmatpush1.msra.mxu0 0.0
    %1724 = vmatprep.subr.mxu0 0.0
    %1725 = vmatpush1.msra.mxu0 0.0
    %1726 = vmatprep.subr.mxu0 0.0
    %1727 = vmatpush1.msra.mxu0 0.0
    %1728 = vmatprep.subr.mxu0 0.0
    %1729 = vmatpush1.msra.mxu0 0.0
    %1730 = vmatprep.subr.mxu0 0.0
    %1731 = vmatpush1.msra.mxu0 0.0
    %1732 = vmatprep.mubr.f32.mxu0 0.0
    %1733 = vmatmul.mubr.f32.gmra.mrb[0].mxu0 %v37
    %v1734 = vpop.f32.mrb[0].mxu0
    %v1735 = vadd.f32 0.0, %v1734
    %v1736 = vpop.f32.mrb[0].mxu0
    %1737 = vdwg.mxu0
    %v1739 = vsel %vm109, %v1735, 0
    %1741 = vmatprep.subr.mxu0 0.0
    %1742 = vmatpush1.msra.mxu0 %v30
    %1743 = vmatprep.subr.mxu0 0.0
    %1744 = vmatpush1.msra.mxu0 %v31
    %1745 = vmatprep.subr.mxu0 0.0
    %1746 = vmatpush1.msra.mxu0 %v32
    %1747 = vmatprep.subr.mxu0 0.0
    %1748 = vmatpush1.msra.mxu0 0.0
    %1749 = vmatprep.subr.mxu0 0.0
    %1750 = vmatpush1.msra.mxu0 0.0
    %1751 = vmatprep.subr.mxu0 0.0
    %1752 = vmatpush1.msra.mxu0 0.0
    %1753 = vmatprep.subr.mxu0 0.0
    %1754 = vmatpush1.msra.mxu0 0.0
    %1755 = vmatprep.subr.mxu0 0.0
    %1756 = vmatpush1.msra.mxu0 0.0
    %1757 = vmatprep.subr.mxu0 0.0
    %1758 = vmatpush1.msra.mxu0 0.0
    %1759 = vmatprep.subr.mxu0 0.0
    %1760 = vmatpush1.msra.mxu0 0.0
    %1761 = vmatprep.subr.mxu0 0.0
    %1762 = vmatpush1.msra.mxu0 0.0
    %1763 = vmatprep.subr.mxu0 0.0
    %1764 = vmatpush1.msra.mxu0 0.0
    %1765 = vmatprep.subr.mxu0 0.0
    %1766 = vmatpush1.msra.mxu0 0.0
    %1767 = vmatprep.subr.mxu0 0.0
    %1768 = vmatpush1.msra.mxu0 0.0
    %1769 = vmatprep.subr.mxu0 0.0
    %1770 = vmatpush1.msra.mxu0 0.0
    %1771 = vmatprep.subr.mxu0 0.0
    %1772 = vmatpush1.msra.mxu0 0.0
    %1773 = vmatprep.subr.mxu0 0.0
    %1774 = vmatpush1.msra.mxu0 0.0
    %1775 = vmatprep.subr.mxu0 0.0
    %1776 = vmatpush1.msra.mxu0 0.0
    %1777 = vmatprep.subr.mxu0 0.0
    %1778 = vmatpush1.msra.mxu0 0.0
    %1779 = vmatprep.subr.mxu0 0.0
    %1780 = vmatpush1.msra.mxu0 0.0
    %1781 = vmatprep.subr.mxu0 0.0
    %1782 = vmatpush1.msra.mxu0 0.0
    %1783 = vmatprep.subr.mxu0 0.0
    %1784 = vmatpush1.msra.mxu0 0.0
    %1785 = vmatprep.subr.mxu0 0.0
    %1786 = vmatpush1.msra.mxu0 0.0
    %1787 = vmatprep.subr.mxu0 0.0
    %1788 = vmatpush1.msra.mxu0 0.0
    %1789 = vmatprep.subr.mxu0 0.0
    %1790 = vmatpush1.msra.mxu0 0.0
    %1791 = vmatprep.subr.mxu0 0.0
    %1792 = vmatpush1.msra.mxu0 0.0
    %1793 = vmatprep.subr.mxu0 0.0
    %1794 = vmatpush1.msra.mxu0 0.0
    %1795 = vmatprep.subr.mxu0 0.0
    %1796 = vmatpush1.msra.mxu0 0.0
    %1797 = vmatprep.subr.mxu0 0.0
    %1798 = vmatpush1.msra.mxu0 0.0
    %1799 = vmatprep.subr.mxu0 0.0
    %1800 = vmatpush1.msra.mxu0 0.0
    %1801 = vmatprep.subr.mxu0 0.0
    %1802 = vmatpush1.msra.mxu0 0.0
    %1803 = vmatprep.subr.mxu0 0.0
    %1804 = vmatpush1.msra.mxu0 0.0
    %1805 = vmatprep.mubr.f32.mxu0 0.0
    %1806 = vmatmul.mubr.f32.gmra.mrb[0].mxu0 %v1739
    %v1807 = vpop.f32.mrb[0].mxu0
    %v1808 = vadd.f32 0.0, %v1807
    %v1809 = vpop.f32.mrb[0].mxu0
    %1810 = vdwg.mxu0
    %s1811 = scalar_lea.vmem [#allocation5], 88
    %1812 = vst.msk [vmem:[%s1811] sm:$0xff] %vm183, %v1808
    // Predicated region
    $region18: #{tpu_custom_call.1} parent=1 // pred_check
      _
    $region19: #{tpu_custom_call.1} parent=1 // pred_check_branch
      %1814 = sbr.rel (0) target = $region21
    $region20: #{tpu_custom_call.1} parent=1 // pred_region
      %s1816 = ssub.s32 1536, 1536
      %1817 = vsyncadd [#allocation4], %s1816
      %s1818 = sshll.u32 [#allocation5], 4
      %s1819 = int_to_ptr.vmem [resolvable:$true] %s1818
      %1824 = dma.vmem_to_hbm [thread:$0]  %s1819, 1536, %s3, [#allocation4], 128, 128, 8
    $region21: #{tpu_custom_call.1} parent=1 // pred_fallthru
      _
    // Predicated region
    $region22: #{tpu_custom_call.1} parent=1 // pred_check
      _
    $region23: #{tpu_custom_call.1} parent=1 // pred_check_branch
      %1826 = sbr.rel (0) target = $region25
    $region24: #{tpu_custom_call.1} parent=1 // pred_region
      %1827 = dma.done [#allocation4], 1536
    $region25: #{tpu_custom_call.1} parent=1 // pred_fallthru
      _
    %1828 = vsyncpa [#allocation3], 1
    %1829 = vsyncpa [#allocation4], 1

</llo_original>
